<compile_context>
chip_gen: v5e
topology: v5e:2x2
jax: 0.10.0
libtpu: 0.0.40
codegen_flags: <defaults>
</compile_context>

<pallas_src>
import functools

import jax
import jax.numpy as jnp
from jax import lax
from jax.experimental import pallas as pl
from jax.experimental.pallas import tpu as pltpu

EPS = 1e-5  # GroupNorm eps


def _silu(x):
    return x * jax.nn.sigmoid(x)


def _group_norm(x, gmat_cg, gmat_gc, gamma, beta, inv_n):
    """GroupNorm over a (Bt, L, C) tile, per-sample / per-group statistics.

    gmat_cg: (C, G) one-hot channel->group reduce; gmat_gc: (G, C) broadcast back.
    Two-pass (centered) variance for numerical robustness.
    """
    s1 = jnp.sum(x, axis=1)                                                  # (Bt, C)
    mean_g = jnp.dot(s1, gmat_cg, preferred_element_type=jnp.float32) * inv_n
    mean_c = jnp.dot(mean_g, gmat_gc, preferred_element_type=jnp.float32)    # (Bt, C)
    d = x - mean_c[:, None, :]
    s2 = jnp.sum(d * d, axis=1)                                              # (Bt, C)
    var_g = jnp.dot(s2, gmat_cg, preferred_element_type=jnp.float32) * inv_n
    var_c = jnp.dot(var_g, gmat_gc, preferred_element_type=jnp.float32)      # (Bt, C)
    xn = d * lax.rsqrt(var_c[:, None, :] + EPS)
    return xn * gamma + beta                                                 # gamma/beta: (1, C)


def _conv3_fused(h, cat_ref, w_ref, b, mm_dtype):
    """'same' Conv1d (k=3) as ONE matmul: (Bt*L, 3C) x (3C, Cout).

    h: (Bt, L, C) f32.  cat_ref: VMEM (Bt, L, 3C) staging buffer whose lane thirds
    hold [x[l-1] | x[l] | x[l+1]] with explicit zero halos at the sequence ends.
    """
    bt, L, C = h.shape
    cout = w_ref.shape[1]
    zrow = jnp.zeros((bt, 1, C), jnp.float32)
    cat_ref[:, :, C:2 * C] = h                          # centre tap  x[l]
    cat_ref[:, 0:1, 0:C] = zrow                         # halo: x[-1] = 0
    cat_ref[:, 1:L, 0:C] = h[:, 0:L - 1, :]             # previous tap x[l-1]
    cat_ref[:, L - 1:L, 2 * C:3 * C] = zrow             # halo: x[L] = 0
    cat_ref[:, 0:L - 1, 2 * C:3 * C] = h[:, 1:L, :]     # next tap    x[l+1]
    lhs = cat_ref[...].reshape(bt * L, 3 * C).astype(mm_dtype)
    y = jnp.dot(lhs, w_ref[...], preferred_element_type=jnp.float32) + b
    return y.reshape(bt, L, cout)


def unet_block_kernel(
    x_ref, emb_ref,
    g0cg_ref, g0gc_ref, gn0_g_ref, gn0_b_ref,
    w0_ref, b0_ref,
    aff_w_ref, aff_b_ref,
    g1cg_ref, g1gc_ref, gn1_g_ref, gn1_b_ref,
    w1_ref, b1_ref,
    ws_ref, bs_ref,
    out_ref,
    cat0_ref, cat1_ref,
    *, bt, length, c_in, c_out, inv_n0, inv_n1, skip_scale, mm_dtype,
):
    L = length

    # (Bt, Cin, L) -> (Bt, L, Cin): per-sample 2-D transposes (XLU), no HBM pass.
    x = jnp.stack([x_ref[b].T for b in range(bt)], axis=0)        # (Bt, L, Cin) f32

    # ---- conv0 branch: GroupNorm -> SiLU -> fused 3-tap Conv1d ----
    h = _group_norm(x, g0cg_ref[...], g0gc_ref[...],
                    gn0_g_ref[...], gn0_b_ref[...], inv_n0)
    h = _silu(h)
    h = _conv3_fused(h, cat0_ref, w0_ref, b0_ref[...], mm_dtype)  # (Bt, L, Cout)

    # ---- adaptive scale/shift: single (Bt, E) x (E, 2*Cout) matmul ----
    emb = emb_ref[...].reshape(bt, -1).astype(mm_dtype)           # (Bt, E)
    par = jnp.dot(emb, aff_w_ref[...],
                  preferred_element_type=jnp.float32) + aff_b_ref[...]   # (Bt, 2*Cout)
    scale = par[:, 0:c_out]
    shift = par[:, c_out:2 * c_out]

    hn = _group_norm(h, g1cg_ref[...], g1gc_ref[...],
                     gn1_g_ref[...], gn1_b_ref[...], inv_n1)
    h = _silu(shift[:, None, :] + hn * (scale[:, None, :] + 1.0))  # torch.addcmul
    # Dropout(p=0.0) in eval mode is the identity.
    h = _conv3_fused(h, cat1_ref, w1_ref, b1_ref[...], mm_dtype)   # (Bt, L, Cout)

    # ---- 1x1 skip connection + residual ----
    xf = x.reshape(bt * L, c_in).astype(mm_dtype)
    skip = jnp.dot(xf, ws_ref[...], preferred_element_type=jnp.float32) + bs_ref[...]
    y = (h + skip.reshape(bt, L, c_out)) * skip_scale              # (Bt, L, Cout)

    # store as (Bt, Cout, L): L sits on the lane axis (lane-dense for L >= 128)
    for b in range(bt):
        out_ref[b] = y[b].T


def unet_block_1d(x_bcl, emb, p, *, groups0, groups1, skip_scale=1.0,
                  batch_block=8, matmul_dtype=jnp.float32):
    """x_bcl: (B, Cin, L), emb: (B, E) -> (B, Cout, L) float32."""
    B, Cin, L = x_bcl.shape
    E = emb.shape[1]
    Cout = p["conv0_w"].shape[0]
    assert Cin % groups0 == 0 and Cout % groups1 == 0, "channels must divide groups"
    assert L >= 2

    # largest divisor of B that is <= batch_block
    bt = max(d for d in range(1, min(batch_block, B) + 1) if B % d == 0)

    f32 = jnp.float32
    x_bcl = x_bcl.astype(f32)
    emb3 = emb.astype(f32)[:, None, :]                              # (B, 1, E)

    # fused 3-tap conv weights: (Cout, Cin, 3) -> (3*Cin, Cout), rows = [k-1 | k | k+1]
    w0cat = jnp.transpose(p["conv0_w"], (2, 1, 0)).reshape(3 * Cin, Cout).astype(matmul_dtype)
    w1cat = jnp.transpose(p["conv1_w"], (2, 1, 0)).reshape(3 * Cout, Cout).astype(matmul_dtype)
    ws = jnp.transpose(p["skip_w"][:, :, 0], (1, 0)).astype(matmul_dtype)   # (Cin, Cout)
    aff_w = jnp.transpose(p["affine_w"], (1, 0)).astype(matmul_dtype)       # (E, 2*Cout)
    aff_b = p["affine_b"][None, :].astype(f32)                              # (1, 2*Cout)

    def group_mats(C, G):
        c = jnp.arange(C)
        g = jnp.arange(G)
        gc = (c[None, :] // (C // G) == g[:, None]).astype(f32)             # (G, C)
        return jnp.transpose(gc, (1, 0)), gc                                # (C,G), (G,C)

    g0cg, g0gc = group_mats(Cin, groups0)
    g1cg, g1gc = group_mats(Cout, groups1)
    row = lambda v: v[None, :].astype(f32)

    inputs = (
        x_bcl, emb3,
        g0cg, g0gc, row(p["gn0_g"]), row(p["gn0_b"]),
        w0cat, row(p["conv0_b"]),
        aff_w, aff_b,
        g1cg, g1gc, row(p["gn1_g"]), row(p["gn1_b"]),
        w1cat, row(p["conv1_b"]),
        ws, row(p["skip_b"]),
    )

    def shared_spec(a):
        zeros = (0,) * a.ndim
        return pl.BlockSpec(a.shape, lambda i, _z=zeros: _z)

    in_specs = [
        pl.BlockSpec((bt, Cin, L), lambda i: (i, 0, 0)),       # x  (per batch-block)
        pl.BlockSpec((bt, 1, E), lambda i: (i, 0, 0)),         # emb
    ] + [shared_spec(a) for a in inputs[2:]]
    out_spec = pl.BlockSpec((bt, Cout, L), lambda i: (i, 0, 0))

    kernel = functools.partial(
        unet_block_kernel,
        bt=bt, length=L, c_in=Cin, c_out=Cout,
        inv_n0=1.0 / (L * (Cin // groups0)),
        inv_n1=1.0 / (L * (Cout // groups1)),
        skip_scale=skip_scale, mm_dtype=matmul_dtype,
    )

    return pl.pallas_call(
        kernel,
        out_shape=jax.ShapeDtypeStruct((B, Cout, L), f32),
        grid_spec=pltpu.PrefetchScalarGridSpec(
            num_scalar_prefetch=0,
            grid=(B // bt,),
            in_specs=in_specs,
            out_specs=out_spec,
            scratch_shapes=[pltpu.VMEM((bt, L, 3 * Cin), f32),    # conv0 tap buffer
                            pltpu.VMEM((bt, L, 3 * Cout), f32)],  # conv1 tap buffer
        ),
        compiler_params=pltpu.CompilerParams(
            dimension_semantics=("parallel",)),
    )(*inputs)


# ------------------------- pure-JAX reference (for checking) -------------------------
def reference(x, emb, p, *, groups0, groups1, skip_scale=1.0):
    Cout = p["conv0_w"].shape[0]

    def gn(x, G, gamma, beta):
        b, c, l = x.shape
        xg = x.reshape(b, G, (c // G) * l)
        mean = xg.mean(-1, keepdims=True)
        var = xg.var(-1, keepdims=True)
        xn = ((xg - mean) / jnp.sqrt(var + EPS)).reshape(b, c, l)
        return xn * gamma[None, :, None] + beta[None, :, None]

    def conv1d(x, w, b, pad):
        y = lax.conv_general_dilated(x, w, (1,), [(pad, pad)],
                                     dimension_numbers=("NCH", "OIH", "NCH"))
        return y + b[None, :, None]

    silu = jax.nn.silu
    h = conv1d(silu(gn(x, groups0, p["gn0_g"], p["gn0_b"])), p["conv0_w"], p["conv0_b"], 1)
    params = emb @ p["affine_w"].T + p["affine_b"]          # (B, 2*Cout)
    scale = params[:, :Cout, None]
    shift = params[:, Cout:, None]
    h = silu(shift + gn(h, groups1, p["gn1_g"], p["gn1_b"]) * (scale + 1.0))
    h = conv1d(h, p["conv1_w"], p["conv1_b"], 1)
    sk = conv1d(x, p["skip_w"], p["skip_b"], 0)
    return (h + sk) * skip_scale


# ------------------------------------ main ------------------------------------------
if __name__ == "__main__":
    B, Cin, Cout, L, E = 4, 8, 16, 16, 32
    # GroupNorm1d (EDM-style): num_groups = min(32, channels // 4)
    G0 = max(1, min(32, Cin // 4))
    G1 = max(1, min(32, Cout // 4))

    key = jax.random.PRNGKey(0)
    ks = jax.random.split(key, 16)

    def kaiming(k, shape, fan_in):
        return (1.0 / fan_in) ** 0.5 * jax.random.normal(k, shape, jnp.float32)

    # Deterministic synthetic parameters (module __init__ gives the shapes).
    # NOTE: the module inits conv1 with init_weight=0.0; small nonzero values are
    # used here so the conv1 path of the kernel is actually exercised.
    params = {
        "gn0_g": 1.0 + 0.1 * jax.random.normal(ks[0], (Cin,), jnp.float32),
        "gn0_b": 0.1 * jax.random.normal(ks[1], (Cin,), jnp.float32),
        "conv0_w": kaiming(ks[2], (Cout, Cin, 3), Cin * 3),
        "conv0_b": 0.1 * jax.random.normal(ks[3], (Cout,), jnp.float32),
        "affine_w": kaiming(ks[4], (2 * Cout, E), E),
        "affine_b": 0.1 * jax.random.normal(ks[5], (2 * Cout,), jnp.float32),
        "gn1_g": 1.0 + 0.1 * jax.random.normal(ks[6], (Cout,), jnp.float32),
        "gn1_b": 0.1 * jax.random.normal(ks[7], (Cout,), jnp.float32),
        "conv1_w": kaiming(ks[8], (Cout, Cout, 3), Cout * 3),
        "conv1_b": 0.1 * jax.random.normal(ks[9], (Cout,), jnp.float32),
        "skip_w": kaiming(ks[10], (Cout, Cin, 1), Cin * 1),
        "skip_b": 0.1 * jax.random.normal(ks[11], (Cout,), jnp.float32),
    }

    x = jax.random.normal(ks[12], (B, Cin, L), jnp.float32)
    emb = jax.random.normal(ks[13], (B, E), jnp.float32)

    ref = reference(x, emb, params, groups0=G0, groups1=G1, skip_scale=1.0)

    # f32 MXU path: tight check against the pure-JAX reference.
    out = unet_block_1d(x, emb, params, groups0=G0, groups1=G1, skip_scale=1.0,
                        batch_block=2)
    out = jax.block_until_ready(out)
    assert out.shape == (B, Cout, L), out.shape
    assert jnp.allclose(out, ref, atol=2e-3, rtol=2e-3), float(jnp.max(jnp.abs(out - ref)))

    # bf16 MXU path (f32 accumulation / f32 GroupNorm): loose sanity check.
    out_bf16 = unet_block_1d(x, emb, params, groups0=G0, groups1=G1, skip_scale=1.0,
                             batch_block=2, matmul_dtype=jnp.bfloat16)
    out_bf16 = jax.block_until_ready(out_bf16)
    assert out_bf16.shape == (B, Cout, L), out_bf16.shape
    assert jnp.allclose(out_bf16, ref, atol=0.25, rtol=0.25), \
        float(jnp.max(jnp.abs(out_bf16 - ref)))

    print("KERNEL_OK")
</pallas_src>

<mosaic_0001>
module attributes {stable_mosaic.version = 11 : i64} {
  func.func @unet_block_kernel(%arg0: i32, %arg1: memref<2x8x16xf32, #tpu.memory_space<vmem>>, %arg2: memref<2x1x32xf32, #tpu.memory_space<vmem>>, %arg3: memref<8x2xf32, #tpu.memory_space<vmem>>, %arg4: memref<2x8xf32, #tpu.memory_space<vmem>>, %arg5: memref<1x8xf32, #tpu.memory_space<vmem>>, %arg6: memref<1x8xf32, #tpu.memory_space<vmem>>, %arg7: memref<24x16xf32, #tpu.memory_space<vmem>>, %arg8: memref<1x16xf32, #tpu.memory_space<vmem>>, %arg9: memref<32x32xf32, #tpu.memory_space<vmem>>, %arg10: memref<1x32xf32, #tpu.memory_space<vmem>>, %arg11: memref<16x4xf32, #tpu.memory_space<vmem>>, %arg12: memref<4x16xf32, #tpu.memory_space<vmem>>, %arg13: memref<1x16xf32, #tpu.memory_space<vmem>>, %arg14: memref<1x16xf32, #tpu.memory_space<vmem>>, %arg15: memref<48x16xf32, #tpu.memory_space<vmem>>, %arg16: memref<1x16xf32, #tpu.memory_space<vmem>>, %arg17: memref<8x16xf32, #tpu.memory_space<vmem>>, %arg18: memref<1x16xf32, #tpu.memory_space<vmem>>, %arg19: memref<2x16x16xf32, #tpu.memory_space<vmem>>, %arg20: memref<2x16x24xf32, #tpu.memory_space<vmem>>, %arg21: memref<2x16x48xf32, #tpu.memory_space<vmem>>) attributes {dimension_semantics = [#tpu.dimension_semantics<parallel>], iteration_bounds = array<i64: 2>, scalar_prefetch = 0 : i64, scratch_operands = 2 : i64, tpu.core_type = #tpu.core_type<tc>, window_params = [{transform_indices = @transform_0, window_bounds = array<i64: 2, 8, 16>}, {transform_indices = @transform_1, window_bounds = array<i64: 2, 1, 32>}, {pipeline_mode = #tpu.pipeline_mode<synchronous>, transform_indices = @transform_2, window_bounds = array<i64: 8, 2>}, {pipeline_mode = #tpu.pipeline_mode<synchronous>, transform_indices = @transform_3, window_bounds = array<i64: 2, 8>}, {pipeline_mode = #tpu.pipeline_mode<synchronous>, transform_indices = @transform_4, window_bounds = array<i64: 1, 8>}, {pipeline_mode = #tpu.pipeline_mode<synchronous>, transform_indices = @transform_5, window_bounds = array<i64: 1, 8>}, {pipeline_mode = #tpu.pipeline_mode<synchronous>, transform_indices = @transform_6, window_bounds = array<i64: 24, 16>}, {pipeline_mode = #tpu.pipeline_mode<synchronous>, transform_indices = @transform_7, window_bounds = array<i64: 1, 16>}, {pipeline_mode = #tpu.pipeline_mode<synchronous>, transform_indices = @transform_8, window_bounds = array<i64: 32, 32>}, {pipeline_mode = #tpu.pipeline_mode<synchronous>, transform_indices = @transform_9, window_bounds = array<i64: 1, 32>}, {pipeline_mode = #tpu.pipeline_mode<synchronous>, transform_indices = @transform_10, window_bounds = array<i64: 16, 4>}, {pipeline_mode = #tpu.pipeline_mode<synchronous>, transform_indices = @transform_11, window_bounds = array<i64: 4, 16>}, {pipeline_mode = #tpu.pipeline_mode<synchronous>, transform_indices = @transform_12, window_bounds = array<i64: 1, 16>}, {pipeline_mode = #tpu.pipeline_mode<synchronous>, transform_indices = @transform_13, window_bounds = array<i64: 1, 16>}, {pipeline_mode = #tpu.pipeline_mode<synchronous>, transform_indices = @transform_14, window_bounds = array<i64: 48, 16>}, {pipeline_mode = #tpu.pipeline_mode<synchronous>, transform_indices = @transform_15, window_bounds = array<i64: 1, 16>}, {pipeline_mode = #tpu.pipeline_mode<synchronous>, transform_indices = @transform_16, window_bounds = array<i64: 8, 16>}, {pipeline_mode = #tpu.pipeline_mode<synchronous>, transform_indices = @transform_17, window_bounds = array<i64: 1, 16>}, {transform_indices = @transform_18, window_bounds = array<i64: 2, 16, 16>}]} {
    %c0 = arith.constant 0 : index
    %c0_0 = arith.constant 0 : index
    %c0_1 = arith.constant 0 : index
    %0 = vector.load %arg1[%c0, %c0_0, %c0_1] : memref<2x8x16xf32, #tpu.memory_space<vmem>>, vector<1x8x16xf32>
    %1 = vector.shape_cast %0 : vector<1x8x16xf32> to vector<8x16xf32>
    %2 = tpu.transpose %1, [1, 0] : vector<8x16xf32> -> vector<16x8xf32>
    %c1 = arith.constant 1 : index
    %c0_2 = arith.constant 0 : index
    %c0_3 = arith.constant 0 : index
    %3 = vector.load %arg1[%c1, %c0_2, %c0_3] : memref<2x8x16xf32, #tpu.memory_space<vmem>>, vector<1x8x16xf32>
    %4 = vector.shape_cast %3 : vector<1x8x16xf32> to vector<8x16xf32>
    %5 = tpu.transpose %4, [1, 0] : vector<8x16xf32> -> vector<16x8xf32>
    %6 = vector.shape_cast %2 : vector<16x8xf32> to vector<1x16x8xf32>
    %7 = vector.shape_cast %5 : vector<16x8xf32> to vector<1x16x8xf32>
    %8 = tpu.concatenate %6, %7 in 0 : vector<1x16x8xf32>, vector<1x16x8xf32> -> vector<2x16x8xf32>
    %c0_4 = arith.constant 0 : index
    %c0_5 = arith.constant 0 : index
    %9 = vector.load %arg3[%c0_4, %c0_5] : memref<8x2xf32, #tpu.memory_space<vmem>>, vector<8x2xf32>
    %c0_6 = arith.constant 0 : index
    %c0_7 = arith.constant 0 : index
    %10 = vector.load %arg4[%c0_6, %c0_7] : memref<2x8xf32, #tpu.memory_space<vmem>>, vector<2x8xf32>
    %c0_8 = arith.constant 0 : index
    %c0_9 = arith.constant 0 : index
    %11 = vector.load %arg5[%c0_8, %c0_9] : memref<1x8xf32, #tpu.memory_space<vmem>>, vector<1x8xf32>
    %c0_10 = arith.constant 0 : index
    %c0_11 = arith.constant 0 : index
    %12 = vector.load %arg6[%c0_10, %c0_11] : memref<1x8xf32, #tpu.memory_space<vmem>>, vector<1x8xf32>
    %cst = arith.constant dense<0.000000e+00> : vector<2x8xf32>
    %13 = vector.multi_reduction <add>, %8, %cst [1] : vector<2x16x8xf32> to vector<2x8xf32>
    %cst_12 = arith.constant dense<0.000000e+00> : vector<2x2xf32>
    %14 = tpu.matmul %13, %9, %cst_12 {dimension_numbers = #tpu.dot_dimension_numbers<[1], [0], [0], [1], [0, 0, 1, 1], [], []>} : vector<2x8xf32>, vector<8x2xf32>, vector<2x2xf32> -> vector<2x2xf32>
    %cst_13 = arith.constant 1.562500e-02 : f32
    %15 = vector.broadcast %cst_13 : f32 to vector<2x2xf32>
    %16 = arith.mulf %14, %15 : vector<2x2xf32>
    %cst_14 = arith.constant dense<0.000000e+00> : vector<2x8xf32>
    %17 = tpu.matmul %16, %10, %cst_14 {dimension_numbers = #tpu.dot_dimension_numbers<[1], [0], [0], [1], [0, 0, 1, 1], [], []>} : vector<2x2xf32>, vector<2x8xf32>, vector<2x8xf32> -> vector<2x8xf32>
    %18 = vector.shape_cast %17 : vector<2x8xf32> to vector<2x1x8xf32>
    %19 = vector.broadcast %18 : vector<2x1x8xf32> to vector<2x16x8xf32>
    %20 = arith.subf %8, %19 : vector<2x16x8xf32>
    %21 = arith.mulf %20, %20 : vector<2x16x8xf32>
    %cst_15 = arith.constant dense<0.000000e+00> : vector<2x8xf32>
    %22 = vector.multi_reduction <add>, %21, %cst_15 [1] : vector<2x16x8xf32> to vector<2x8xf32>
    %cst_16 = arith.constant dense<0.000000e+00> : vector<2x2xf32>
    %23 = tpu.matmul %22, %9, %cst_16 {dimension_numbers = #tpu.dot_dimension_numbers<[1], [0], [0], [1], [0, 0, 1, 1], [], []>} : vector<2x8xf32>, vector<8x2xf32>, vector<2x2xf32> -> vector<2x2xf32>
    %cst_17 = arith.constant 1.562500e-02 : f32
    %24 = vector.broadcast %cst_17 : f32 to vector<2x2xf32>
    %25 = arith.mulf %23, %24 : vector<2x2xf32>
    %cst_18 = arith.constant dense<0.000000e+00> : vector<2x8xf32>
    %26 = tpu.matmul %25, %10, %cst_18 {dimension_numbers = #tpu.dot_dimension_numbers<[1], [0], [0], [1], [0, 0, 1, 1], [], []>} : vector<2x2xf32>, vector<2x8xf32>, vector<2x8xf32> -> vector<2x8xf32>
    %27 = vector.shape_cast %26 : vector<2x8xf32> to vector<2x1x8xf32>
    %cst_19 = arith.constant 9.99999974E-6 : f32
    %28 = vector.broadcast %cst_19 : f32 to vector<2x1x8xf32>
    %29 = arith.addf %27, %28 : vector<2x1x8xf32>
    %30 = math.rsqrt %29 : vector<2x1x8xf32>
    %31 = vector.broadcast %30 : vector<2x1x8xf32> to vector<2x16x8xf32>
    %32 = arith.mulf %20, %31 : vector<2x16x8xf32>
    %33 = vector.shape_cast %11 : vector<1x8xf32> to vector<1x1x8xf32>
    %34 = vector.broadcast %33 : vector<1x1x8xf32> to vector<2x16x8xf32>
    %35 = arith.mulf %32, %34 : vector<2x16x8xf32>
    %36 = vector.shape_cast %12 : vector<1x8xf32> to vector<1x1x8xf32>
    %37 = vector.broadcast %36 : vector<1x1x8xf32> to vector<2x16x8xf32>
    %38 = arith.addf %35, %37 : vector<2x16x8xf32>
    %39 = arith.negf %38 : vector<2x16x8xf32>
    %40 = math.exp %39 : vector<2x16x8xf32>
    %cst_20 = arith.constant 1.000000e+00 : f32
    %41 = vector.broadcast %cst_20 : f32 to vector<2x16x8xf32>
    %42 = arith.addf %41, %40 : vector<2x16x8xf32>
    %43 = arith.divf %41, %42 : vector<2x16x8xf32>
    %44 = arith.mulf %38, %43 : vector<2x16x8xf32>
    %c0_21 = arith.constant 0 : index
    %c0_22 = arith.constant 0 : index
    %45 = vector.load %arg8[%c0_21, %c0_22] : memref<1x16xf32, #tpu.memory_space<vmem>>, vector<1x16xf32>
    %cst_23 = arith.constant 0.000000e+00 : f32
    %46 = vector.broadcast %cst_23 : f32 to vector<2x1x8xf32>
    %c0_24 = arith.constant 0 : index
    %c0_25 = arith.constant 0 : index
    %c8 = arith.constant 8 : index
    %47 = vector.load %arg20[%c0_24, %c0_25, %c8] : memref<2x16x24xf32, #tpu.memory_space<vmem>>, vector<2x16x8xf32>
    tpu.vector_store %arg20[%c0_24, %c0_25, %c8], %44 {strides = array<i32>} : memref<2x16x24xf32, #tpu.memory_space<vmem>>, vector<2x16x8xf32>,
    %c0_26 = arith.constant 0 : index
    %c0_27 = arith.constant 0 : index
    %c0_28 = arith.constant 0 : index
    %48 = vector.load %arg20[%c0_26, %c0_27, %c0_28] : memref<2x16x24xf32, #tpu.memory_space<vmem>>, vector<2x1x8xf32>
    tpu.vector_store %arg20[%c0_26, %c0_27, %c0_28], %46 {strides = array<i32>} : memref<2x16x24xf32, #tpu.memory_space<vmem>>, vector<2x1x8xf32>,
    %49 = vector.extract_strided_slice %44 {offsets = [0, 0, 0], sizes = [2, 15, 8], strides = [1, 1, 1]} : vector<2x16x8xf32> to vector<2x15x8xf32>
    %c0_29 = arith.constant 0 : index
    %c1_30 = arith.constant 1 : index
    %c0_31 = arith.constant 0 : index
    %50 = vector.load %arg20[%c0_29, %c1_30, %c0_31] : memref<2x16x24xf32, #tpu.memory_space<vmem>>, vector<2x15x8xf32>
    tpu.vector_store %arg20[%c0_29, %c1_30, %c0_31], %49 {strides = array<i32>} : memref<2x16x24xf32, #tpu.memory_space<vmem>>, vector<2x15x8xf32>,
    %c0_32 = arith.constant 0 : index
    %c15 = arith.constant 15 : index
    %c16 = arith.constant 16 : index
    %51 = vector.load %arg20[%c0_32, %c15, %c16] : memref<2x16x24xf32, #tpu.memory_space<vmem>>, vector<2x1x8xf32>
    tpu.vector_store %arg20[%c0_32, %c15, %c16], %46 {strides = array<i32>} : memref<2x16x24xf32, #tpu.memory_space<vmem>>, vector<2x1x8xf32>,
    %52 = vector.extract_strided_slice %44 {offsets = [0, 1, 0], sizes = [2, 15, 8], strides = [1, 1, 1]} : vector<2x16x8xf32> to vector<2x15x8xf32>
    %c0_33 = arith.constant 0 : index
    %c0_34 = arith.constant 0 : index
    %c16_35 = arith.constant 16 : index
    %53 = vector.load %arg20[%c0_33, %c0_34, %c16_35] : memref<2x16x24xf32, #tpu.memory_space<vmem>>, vector<2x15x8xf32>
    tpu.vector_store %arg20[%c0_33, %c0_34, %c16_35], %52 {strides = array<i32>} : memref<2x16x24xf32, #tpu.memory_space<vmem>>, vector<2x15x8xf32>,
    %c0_36 = arith.constant 0 : index
    %c0_37 = arith.constant 0 : index
    %c0_38 = arith.constant 0 : index
    %54 = vector.load %arg20[%c0_36, %c0_37, %c0_38] : memref<2x16x24xf32, #tpu.memory_space<vmem>>, vector<2x16x24xf32>
    %55 = vector.shape_cast %54 : vector<2x16x24xf32> to vector<32x24xf32>
    %c0_39 = arith.constant 0 : index
    %c0_40 = arith.constant 0 : index
    %56 = vector.load %arg7[%c0_39, %c0_40] : memref<24x16xf32, #tpu.memory_space<vmem>>, vector<24x16xf32>
    %cst_41 = arith.constant dense<0.000000e+00> : vector<32x16xf32>
    %57 = tpu.matmul %55, %56, %cst_41 {dimension_numbers = #tpu.dot_dimension_numbers<[1], [0], [0], [1], [0, 0, 1, 1], [], []>} : vector<32x24xf32>, vector<24x16xf32>, vector<32x16xf32> -> vector<32x16xf32>
    %58 = vector.broadcast %45 : vector<1x16xf32> to vector<32x16xf32>
    %59 = arith.addf %57, %58 : vector<32x16xf32>
    %60 = vector.shape_cast %59 : vector<32x16xf32> to vector<2x16x16xf32>
    %c0_42 = arith.constant 0 : index
    %c0_43 = arith.constant 0 : index
    %c0_44 = arith.constant 0 : index
    %61 = vector.load %arg2[%c0_42, %c0_43, %c0_44] : memref<2x1x32xf32, #tpu.memory_space<vmem>>, vector<2x1x32xf32>
    %62 = vector.shape_cast %61 : vector<2x1x32xf32> to vector<2x32xf32>
    %c0_45 = arith.constant 0 : index
    %c0_46 = arith.constant 0 : index
    %63 = vector.load %arg9[%c0_45, %c0_46] : memref<32x32xf32, #tpu.memory_space<vmem>>, vector<32x32xf32>
    %cst_47 = arith.constant dense<0.000000e+00> : vector<2x32xf32>
    %64 = tpu.matmul %62, %63, %cst_47 {dimension_numbers = #tpu.dot_dimension_numbers<[1], [0], [0], [1], [0, 0, 1, 1], [], []>} : vector<2x32xf32>, vector<32x32xf32>, vector<2x32xf32> -> vector<2x32xf32>
    %c0_48 = arith.constant 0 : index
    %c0_49 = arith.constant 0 : index
    %65 = vector.load %arg10[%c0_48, %c0_49] : memref<1x32xf32, #tpu.memory_space<vmem>>, vector<1x32xf32>
    %66 = vector.broadcast %65 : vector<1x32xf32> to vector<2x32xf32>
    %67 = arith.addf %64, %66 : vector<2x32xf32>
    %68 = vector.extract_strided_slice %67 {offsets = [0, 0], sizes = [2, 16], strides = [1, 1]} : vector<2x32xf32> to vector<2x16xf32>
    %69 = vector.extract_strided_slice %67 {offsets = [0, 16], sizes = [2, 16], strides = [1, 1]} : vector<2x32xf32> to vector<2x16xf32>
    %c0_50 = arith.constant 0 : index
    %c0_51 = arith.constant 0 : index
    %70 = vector.load %arg11[%c0_50, %c0_51] : memref<16x4xf32, #tpu.memory_space<vmem>>, vector<16x4xf32>
    %c0_52 = arith.constant 0 : index
    %c0_53 = arith.constant 0 : index
    %71 = vector.load %arg12[%c0_52, %c0_53] : memref<4x16xf32, #tpu.memory_space<vmem>>, vector<4x16xf32>
    %c0_54 = arith.constant 0 : index
    %c0_55 = arith.constant 0 : index
    %72 = vector.load %arg13[%c0_54, %c0_55] : memref<1x16xf32, #tpu.memory_space<vmem>>, vector<1x16xf32>
    %c0_56 = arith.constant 0 : index
    %c0_57 = arith.constant 0 : index
    %73 = vector.load %arg14[%c0_56, %c0_57] : memref<1x16xf32, #tpu.memory_space<vmem>>, vector<1x16xf32>
    %cst_58 = arith.constant dense<0.000000e+00> : vector<2x16xf32>
    %74 = vector.multi_reduction <add>, %60, %cst_58 [1] : vector<2x16x16xf32> to vector<2x16xf32>
    %cst_59 = arith.constant dense<0.000000e+00> : vector<2x4xf32>
    %75 = tpu.matmul %74, %70, %cst_59 {dimension_numbers = #tpu.dot_dimension_numbers<[1], [0], [0], [1], [0, 0, 1, 1], [], []>} : vector<2x16xf32>, vector<16x4xf32>, vector<2x4xf32> -> vector<2x4xf32>
    %cst_60 = arith.constant 1.562500e-02 : f32
    %76 = vector.broadcast %cst_60 : f32 to vector<2x4xf32>
    %77 = arith.mulf %75, %76 : vector<2x4xf32>
    %cst_61 = arith.constant dense<0.000000e+00> : vector<2x16xf32>
    %78 = tpu.matmul %77, %71, %cst_61 {dimension_numbers = #tpu.dot_dimension_numbers<[1], [0], [0], [1], [0, 0, 1, 1], [], []>} : vector<2x4xf32>, vector<4x16xf32>, vector<2x16xf32> -> vector<2x16xf32>
    %79 = vector.shape_cast %78 : vector<2x16xf32> to vector<2x1x16xf32>
    %80 = vector.broadcast %79 : vector<2x1x16xf32> to vector<2x16x16xf32>
    %81 = arith.subf %60, %80 : vector<2x16x16xf32>
    %82 = arith.mulf %81, %81 : vector<2x16x16xf32>
    %cst_62 = arith.constant dense<0.000000e+00> : vector<2x16xf32>
    %83 = vector.multi_reduction <add>, %82, %cst_62 [1] : vector<2x16x16xf32> to vector<2x16xf32>
    %cst_63 = arith.constant dense<0.000000e+00> : vector<2x4xf32>
    %84 = tpu.matmul %83, %70, %cst_63 {dimension_numbers = #tpu.dot_dimension_numbers<[1], [0], [0], [1], [0, 0, 1, 1], [], []>} : vector<2x16xf32>, vector<16x4xf32>, vector<2x4xf32> -> vector<2x4xf32>
    %cst_64 = arith.constant 1.562500e-02 : f32
    %85 = vector.broadcast %cst_64 : f32 to vector<2x4xf32>
    %86 = arith.mulf %84, %85 : vector<2x4xf32>
    %cst_65 = arith.constant dense<0.000000e+00> : vector<2x16xf32>
    %87 = tpu.matmul %86, %71, %cst_65 {dimension_numbers = #tpu.dot_dimension_numbers<[1], [0], [0], [1], [0, 0, 1, 1], [], []>} : vector<2x4xf32>, vector<4x16xf32>, vector<2x16xf32> -> vector<2x16xf32>
    %88 = vector.shape_cast %87 : vector<2x16xf32> to vector<2x1x16xf32>
    %cst_66 = arith.constant 9.99999974E-6 : f32
    %89 = vector.broadcast %cst_66 : f32 to vector<2x1x16xf32>
    %90 = arith.addf %88, %89 : vector<2x1x16xf32>
    %91 = math.rsqrt %90 : vector<2x1x16xf32>
    %92 = vector.broadcast %91 : vector<2x1x16xf32> to vector<2x16x16xf32>
    %93 = arith.mulf %81, %92 : vector<2x16x16xf32>
    %94 = vector.shape_cast %72 : vector<1x16xf32> to vector<1x1x16xf32>
    %95 = vector.broadcast %94 : vector<1x1x16xf32> to vector<2x16x16xf32>
    %96 = arith.mulf %93, %95 : vector<2x16x16xf32>
    %97 = vector.shape_cast %73 : vector<1x16xf32> to vector<1x1x16xf32>
    %98 = vector.broadcast %97 : vector<1x1x16xf32> to vector<2x16x16xf32>
    %99 = arith.addf %96, %98 : vector<2x16x16xf32>
    %100 = vector.shape_cast %69 : vector<2x16xf32> to vector<2x1x16xf32>
    %101 = vector.shape_cast %68 : vector<2x16xf32> to vector<2x1x16xf32>
    %cst_67 = arith.constant 1.000000e+00 : f32
    %102 = vector.broadcast %cst_67 : f32 to vector<2x1x16xf32>
    %103 = arith.addf %101, %102 : vector<2x1x16xf32>
    %104 = vector.broadcast %103 : vector<2x1x16xf32> to vector<2x16x16xf32>
    %105 = arith.mulf %99, %104 : vector<2x16x16xf32>
    %106 = vector.broadcast %100 : vector<2x1x16xf32> to vector<2x16x16xf32>
    %107 = arith.addf %106, %105 : vector<2x16x16xf32>
    %108 = arith.negf %107 : vector<2x16x16xf32>
    %109 = math.exp %108 : vector<2x16x16xf32>
    %cst_68 = arith.constant 1.000000e+00 : f32
    %110 = vector.broadcast %cst_68 : f32 to vector<2x16x16xf32>
    %111 = arith.addf %110, %109 : vector<2x16x16xf32>
    %112 = arith.divf %110, %111 : vector<2x16x16xf32>
    %113 = arith.mulf %107, %112 : vector<2x16x16xf32>
    %c0_69 = arith.constant 0 : index
    %c0_70 = arith.constant 0 : index
    %114 = vector.load %arg16[%c0_69, %c0_70] : memref<1x16xf32, #tpu.memory_space<vmem>>, vector<1x16xf32>
    %cst_71 = arith.constant 0.000000e+00 : f32
    %115 = vector.broadcast %cst_71 : f32 to vector<2x1x16xf32>
    %c0_72 = arith.constant 0 : index
    %c0_73 = arith.constant 0 : index
    %c16_74 = arith.constant 16 : index
    %116 = vector.load %arg21[%c0_72, %c0_73, %c16_74] : memref<2x16x48xf32, #tpu.memory_space<vmem>>, vector<2x16x16xf32>
    tpu.vector_store %arg21[%c0_72, %c0_73, %c16_74], %113 {strides = array<i32>} : memref<2x16x48xf32, #tpu.memory_space<vmem>>, vector<2x16x16xf32>,
    %c0_75 = arith.constant 0 : index
    %c0_76 = arith.constant 0 : index
    %c0_77 = arith.constant 0 : index
    %117 = vector.load %arg21[%c0_75, %c0_76, %c0_77] : memref<2x16x48xf32, #tpu.memory_space<vmem>>, vector<2x1x16xf32>
    tpu.vector_store %arg21[%c0_75, %c0_76, %c0_77], %115 {strides = array<i32>} : memref<2x16x48xf32, #tpu.memory_space<vmem>>, vector<2x1x16xf32>,
    %118 = vector.extract_strided_slice %113 {offsets = [0, 0, 0], sizes = [2, 15, 16], strides = [1, 1, 1]} : vector<2x16x16xf32> to vector<2x15x16xf32>
    %c0_78 = arith.constant 0 : index
    %c1_79 = arith.constant 1 : index
    %c0_80 = arith.constant 0 : index
    %119 = vector.load %arg21[%c0_78, %c1_79, %c0_80] : memref<2x16x48xf32, #tpu.memory_space<vmem>>, vector<2x15x16xf32>
    tpu.vector_store %arg21[%c0_78, %c1_79, %c0_80], %118 {strides = array<i32>} : memref<2x16x48xf32, #tpu.memory_space<vmem>>, vector<2x15x16xf32>,
    %c0_81 = arith.constant 0 : index
    %c15_82 = arith.constant 15 : index
    %c32 = arith.constant 32 : index
    %120 = vector.load %arg21[%c0_81, %c15_82, %c32] : memref<2x16x48xf32, #tpu.memory_space<vmem>>, vector<2x1x16xf32>
    tpu.vector_store %arg21[%c0_81, %c15_82, %c32], %115 {strides = array<i32>} : memref<2x16x48xf32, #tpu.memory_space<vmem>>, vector<2x1x16xf32>,
    %121 = vector.extract_strided_slice %113 {offsets = [0, 1, 0], sizes = [2, 15, 16], strides = [1, 1, 1]} : vector<2x16x16xf32> to vector<2x15x16xf32>
    %c0_83 = arith.constant 0 : index
    %c0_84 = arith.constant 0 : index
    %c32_85 = arith.constant 32 : index
    %122 = vector.load %arg21[%c0_83, %c0_84, %c32_85] : memref<2x16x48xf32, #tpu.memory_space<vmem>>, vector<2x15x16xf32>
    tpu.vector_store %arg21[%c0_83, %c0_84, %c32_85], %121 {strides = array<i32>} : memref<2x16x48xf32, #tpu.memory_space<vmem>>, vector<2x15x16xf32>,
    %c0_86 = arith.constant 0 : index
    %c0_87 = arith.constant 0 : index
    %c0_88 = arith.constant 0 : index
    %123 = vector.load %arg21[%c0_86, %c0_87, %c0_88] : memref<2x16x48xf32, #tpu.memory_space<vmem>>, vector<2x16x48xf32>
    %124 = vector.shape_cast %123 : vector<2x16x48xf32> to vector<32x48xf32>
    %c0_89 = arith.constant 0 : index
    %c0_90 = arith.constant 0 : index
    %125 = vector.load %arg15[%c0_89, %c0_90] : memref<48x16xf32, #tpu.memory_space<vmem>>, vector<48x16xf32>
    %cst_91 = arith.constant dense<0.000000e+00> : vector<32x16xf32>
    %126 = tpu.matmul %124, %125, %cst_91 {dimension_numbers = #tpu.dot_dimension_numbers<[1], [0], [0], [1], [0, 0, 1, 1], [], []>} : vector<32x48xf32>, vector<48x16xf32>, vector<32x16xf32> -> vector<32x16xf32>
    %127 = vector.broadcast %114 : vector<1x16xf32> to vector<32x16xf32>
    %128 = arith.addf %126, %127 : vector<32x16xf32>
    %129 = vector.shape_cast %128 : vector<32x16xf32> to vector<2x16x16xf32>
    %130 = vector.shape_cast %8 : vector<2x16x8xf32> to vector<32x8xf32>
    %c0_92 = arith.constant 0 : index
    %c0_93 = arith.constant 0 : index
    %131 = vector.load %arg17[%c0_92, %c0_93] : memref<8x16xf32, #tpu.memory_space<vmem>>, vector<8x16xf32>
    %cst_94 = arith.constant dense<0.000000e+00> : vector<32x16xf32>
    %132 = tpu.matmul %130, %131, %cst_94 {dimension_numbers = #tpu.dot_dimension_numbers<[1], [0], [0], [1], [0, 0, 1, 1], [], []>} : vector<32x8xf32>, vector<8x16xf32>, vector<32x16xf32> -> vector<32x16xf32>
    %c0_95 = arith.constant 0 : index
    %c0_96 = arith.constant 0 : index
    %133 = vector.load %arg18[%c0_95, %c0_96] : memref<1x16xf32, #tpu.memory_space<vmem>>, vector<1x16xf32>
    %134 = vector.broadcast %133 : vector<1x16xf32> to vector<32x16xf32>
    %135 = arith.addf %132, %134 : vector<32x16xf32>
    %136 = vector.shape_cast %135 : vector<32x16xf32> to vector<2x16x16xf32>
    %137 = arith.addf %129, %136 : vector<2x16x16xf32>
    %cst_97 = arith.constant 1.000000e+00 : f32
    %138 = vector.broadcast %cst_97 : f32 to vector<2x16x16xf32>
    %139 = arith.mulf %137, %138 : vector<2x16x16xf32>
    %140 = vector.extract_strided_slice %139 {offsets = [0, 0, 0], sizes = [1, 16, 16], strides = [1, 1, 1]} : vector<2x16x16xf32> to vector<1x16x16xf32>
    %141 = vector.shape_cast %140 : vector<1x16x16xf32> to vector<16x16xf32>
    %142 = tpu.transpose %141, [1, 0] : vector<16x16xf32> -> vector<16x16xf32>
    %c0_98 = arith.constant 0 : index
    %c0_99 = arith.constant 0 : index
    %c0_100 = arith.constant 0 : index
    %143 = vector.load %arg19[%c0_98, %c0_99, %c0_100] : memref<2x16x16xf32, #tpu.memory_space<vmem>>, vector<1x16x16xf32>
    %144 = vector.shape_cast %143 : vector<1x16x16xf32> to vector<16x16xf32>
    %145 = vector.shape_cast %142 : vector<16x16xf32> to vector<1x16x16xf32>
    tpu.vector_store %arg19[%c0_98, %c0_99, %c0_100], %145 {strides = array<i32>} : memref<2x16x16xf32, #tpu.memory_space<vmem>>, vector<1x16x16xf32>,
    %146 = vector.extract_strided_slice %139 {offsets = [1, 0, 0], sizes = [1, 16, 16], strides = [1, 1, 1]} : vector<2x16x16xf32> to vector<1x16x16xf32>
    %147 = vector.shape_cast %146 : vector<1x16x16xf32> to vector<16x16xf32>
    %148 = tpu.transpose %147, [1, 0] : vector<16x16xf32> -> vector<16x16xf32>
    %c1_101 = arith.constant 1 : index
    %c0_102 = arith.constant 0 : index
    %c0_103 = arith.constant 0 : index
    %149 = vector.load %arg19[%c1_101, %c0_102, %c0_103] : memref<2x16x16xf32, #tpu.memory_space<vmem>>, vector<1x16x16xf32>
    %150 = vector.shape_cast %149 : vector<1x16x16xf32> to vector<16x16xf32>
    %151 = vector.shape_cast %148 : vector<16x16xf32> to vector<1x16x16xf32>
    tpu.vector_store %arg19[%c1_101, %c0_102, %c0_103], %151 {strides = array<i32>} : memref<2x16x16xf32, #tpu.memory_space<vmem>>, vector<1x16x16xf32>,
    return
  }
  func.func @transform_0(%arg0: i32) -> (i32, i32, i32) {
    %c0_i32 = arith.constant 0 : i32
    %c0_i32_0 = arith.constant 0 : i32
    %c0_i32_1 = arith.constant 0 : i32
    return %arg0, %c0_i32, %c0_i32_0 : i32, i32, i32
  }
  func.func @transform_1(%arg0: i32) -> (i32, i32, i32) {
    %c0_i32 = arith.constant 0 : i32
    %c0_i32_0 = arith.constant 0 : i32
    %c0_i32_1 = arith.constant 0 : i32
    return %arg0, %c0_i32, %c0_i32_0 : i32, i32, i32
  }
  func.func @transform_2(%arg0: i32) -> (i32, i32) {
    %c0_i32 = arith.constant 0 : i32
    %c0_i32_0 = arith.constant 0 : i32
    %c0_i32_1 = arith.constant 0 : i32
    return %c0_i32, %c0_i32_0 : i32, i32
  }
  func.func @transform_3(%arg0: i32) -> (i32, i32) {
    %c0_i32 = arith.constant 0 : i32
    %c0_i32_0 = arith.constant 0 : i32
    %c0_i32_1 = arith.constant 0 : i32
    return %c0_i32, %c0_i32_0 : i32, i32
  }
  func.func @transform_4(%arg0: i32) -> (i32, i32) {
    %c0_i32 = arith.constant 0 : i32
    %c0_i32_0 = arith.constant 0 : i32
    %c0_i32_1 = arith.constant 0 : i32
    return %c0_i32, %c0_i32_0 : i32, i32
  }
  func.func @transform_5(%arg0: i32) -> (i32, i32) {
    %c0_i32 = arith.constant 0 : i32
    %c0_i32_0 = arith.constant 0 : i32
    %c0_i32_1 = arith.constant 0 : i32
    return %c0_i32, %c0_i32_0 : i32, i32
  }
  func.func @transform_6(%arg0: i32) -> (i32, i32) {
    %c0_i32 = arith.constant 0 : i32
    %c0_i32_0 = arith.constant 0 : i32
    %c0_i32_1 = arith.constant 0 : i32
    return %c0_i32, %c0_i32_0 : i32, i32
  }
  func.func @transform_7(%arg0: i32) -> (i32, i32) {
    %c0_i32 = arith.constant 0 : i32
    %c0_i32_0 = arith.constant 0 : i32
    %c0_i32_1 = arith.constant 0 : i32
    return %c0_i32, %c0_i32_0 : i32, i32
  }
  func.func @transform_8(%arg0: i32) -> (i32, i32) {
    %c0_i32 = arith.constant 0 : i32
    %c0_i32_0 = arith.constant 0 : i32
    %c0_i32_1 = arith.constant 0 : i32
    return %c0_i32, %c0_i32_0 : i32, i32
  }
  func.func @transform_9(%arg0: i32) -> (i32, i32) {
    %c0_i32 = arith.constant 0 : i32
    %c0_i32_0 = arith.constant 0 : i32
    %c0_i32_1 = arith.constant 0 : i32
    return %c0_i32, %c0_i32_0 : i32, i32
  }
  func.func @transform_10(%arg0: i32) -> (i32, i32) {
    %c0_i32 = arith.constant 0 : i32
    %c0_i32_0 = arith.constant 0 : i32
    %c0_i32_1 = arith.constant 0 : i32
    return %c0_i32, %c0_i32_0 : i32, i32
  }
  func.func @transform_11(%arg0: i32) -> (i32, i32) {
    %c0_i32 = arith.constant 0 : i32
    %c0_i32_0 = arith.constant 0 : i32
    %c0_i32_1 = arith.constant 0 : i32
    return %c0_i32, %c0_i32_0 : i32, i32
  }
  func.func @transform_12(%arg0: i32) -> (i32, i32) {
    %c0_i32 = arith.constant 0 : i32
    %c0_i32_0 = arith.constant 0 : i32
    %c0_i32_1 = arith.constant 0 : i32
    return %c0_i32, %c0_i32_0 : i32, i32
  }
  func.func @transform_13(%arg0: i32) -> (i32, i32) {
    %c0_i32 = arith.constant 0 : i32
    %c0_i32_0 = arith.constant 0 : i32
    %c0_i32_1 = arith.constant 0 : i32
    return %c0_i32, %c0_i32_0 : i32, i32
  }
  func.func @transform_14(%arg0: i32) -> (i32, i32) {
    %c0_i32 = arith.constant 0 : i32
    %c0_i32_0 = arith.constant 0 : i32
    %c0_i32_1 = arith.constant 0 : i32
    return %c0_i32, %c0_i32_0 : i32, i32
  }
  func.func @transform_15(%arg0: i32) -> (i32, i32) {
    %c0_i32 = arith.constant 0 : i32
    %c0_i32_0 = arith.constant 0 : i32
    %c0_i32_1 = arith.constant 0 : i32
    return %c0_i32, %c0_i32_0 : i32, i32
  }
  func.func @transform_16(%arg0: i32) -> (i32, i32) {
    %c0_i32 = arith.constant 0 : i32
    %c0_i32_0 = arith.constant 0 : i32
    %c0_i32_1 = arith.constant 0 : i32
    return %c0_i32, %c0_i32_0 : i32, i32
  }
  func.func @transform_17(%arg0: i32) -> (i32, i32) {
    %c0_i32 = arith.constant 0 : i32
    %c0_i32_0 = arith.constant 0 : i32
    %c0_i32_1 = arith.constant 0 : i32
    return %c0_i32, %c0_i32_0 : i32, i32
  }
  func.func @transform_18(%arg0: i32) -> (i32, i32, i32) {
    %c0_i32 = arith.constant 0 : i32
    %c0_i32_0 = arith.constant 0 : i32
    %c0_i32_1 = arith.constant 0 : i32
    return %arg0, %c0_i32, %c0_i32_0 : i32, i32, i32
  }
}

</mosaic_0001>

<llo_original>
// kernel: tpu_custom_call.1
$region0: #{tpu_custom_call.1}
  #allocation0 [shape = 'u32[]', space=smem, size = 0x4, offset = 0x4, fixed_abs, tag = 'smem constant byte address 0x4 - core index']
  #allocation1 [shape = 'u32[72,128]{1,0:T(1,128)}', space=vmem, size = 0x9000, scoped, tag = 'internal scratch']
  #allocation2 [shape = 'f32[2,16,24]{2,1,0:T(8,128)}', space=vmem, size = 0x4000, scoped, tag = 'scratch operand']
  #allocation3 [shape = 'f32[2,16,48]{2,1,0:T(8,128)}', space=vmem, size = 0x4000, scoped, tag = 'scratch operand']
  %s0 = inlined_call_operand.vmem [shape: f32[4,8,16], index: 0, kind: input, shape index: {}]
  %s1 = inlined_call_operand.vmem [shape: f32[4,1,32], index: 1, kind: input, shape index: {}]
  %s2 = inlined_call_operand.vmem [shape: f32[8,2], index: 2, kind: input, shape index: {}]
  %s3 = inlined_call_operand.vmem [shape: f32[2,8], index: 3, kind: input, shape index: {}]
  %s4 = inlined_call_operand.vmem [shape: f32[1,8], index: 4, kind: input, shape index: {}]
  %s5 = inlined_call_operand.vmem [shape: f32[1,8], index: 5, kind: input, shape index: {}]
  %s6 = inlined_call_operand.vmem [shape: f32[24,16], index: 6, kind: input, shape index: {}]
  %s7 = inlined_call_operand.vmem [shape: f32[1,16], index: 7, kind: input, shape index: {}]
  %s8 = inlined_call_operand.vmem [shape: f32[32,32], index: 8, kind: input, shape index: {}]
  %s9 = inlined_call_operand.vmem [shape: f32[1,32], index: 9, kind: input, shape index: {}]
  %s10 = inlined_call_operand.vmem [shape: f32[16,4], index: 10, kind: input, shape index: {}]
  %s11 = inlined_call_operand.vmem [shape: f32[4,16], index: 11, kind: input, shape index: {}]
  %s12 = inlined_call_operand.vmem [shape: f32[1,16], index: 12, kind: input, shape index: {}]
  %s13 = inlined_call_operand.vmem [shape: f32[1,16], index: 13, kind: input, shape index: {}]
  %s14 = inlined_call_operand.vmem [shape: f32[48,16], index: 14, kind: input, shape index: {}]
  %s15 = inlined_call_operand.vmem [shape: f32[1,16], index: 15, kind: input, shape index: {}]
  %s16 = inlined_call_operand.vmem [shape: f32[8,16], index: 16, kind: input, shape index: {}]
  %s17 = inlined_call_operand.vmem [shape: f32[1,16], index: 17, kind: input, shape index: {}]
  %s18 = inlined_call_operand.hbm [shape: f32[4,16,16], index: 18, kind: output, shape index: {}]
  %s19 = sld [smem:[#allocation0]]
  $region105: #{tpu_custom_call.1} parent=0
    _
  %s21 = ssub.s32 1, %s19
  %s22 = scalar_select 0, %s21, %s19
  $region1: #{tpu_custom_call.1} parent=0
    #allocation4 [shape = 'u8[32768]{0}', space=vmem, size = 0x8000, scoped, tag = 'output window, operand 0']
    #allocation5 [shape = 's32[2]{0}', space=sflag, size = 0x8, scoped, tag = 'scoped memory for tpu_custom_call.1']
    %23 = vsyncpa [#allocation5], 0
    %s24 = scalar_lea.sflag [#allocation5], 1
    %25 = vsyncpa %s24, 0
    loop: start=0, step=1, limit=4
    $region2: #{tpu_custom_call.1} parent=1 // loop_pre_header
      _
    $region3: #{tpu_custom_call.1} parent=1 // loop_header
      %s27 = sphi 0, %s31
      %p28 = scmp.ge.s32.totalorder %s27, 4
      %s37 = sphi 0, %s39
      %s40 = sphi 0, %s37
      %s41 = sphi 0, %s40
      %s57 = sphi 0, %s41
      %s63 = sphi 0, %s65
      %s66 = sphi 0, %s63
      %s67 = sphi 0, %s66
      %s83 = sphi 0, %s67
      %s87 = sphi 0, %s87
      %s89 = sphi 0, %s87
      %s90 = sphi 0, %s89
      %s104 = sphi 0, %s90
      %s108 = sphi 0, %s108
      %s110 = sphi 0, %s108
      %s111 = sphi 0, %s110
      %s125 = sphi 0, %s111
      %s129 = sphi 0, %s129
      %s131 = sphi 0, %s129
      %s132 = sphi 0, %s131
      %s146 = sphi 0, %s132
      %s150 = sphi 0, %s150
      %s152 = sphi 0, %s150
      %s153 = sphi 0, %s152
      %s167 = sphi 0, %s153
      %s171 = sphi 0, %s171
      %s173 = sphi 0, %s171
      %s174 = sphi 0, %s173
      %s188 = sphi 0, %s174
      %s192 = sphi 0, %s192
      %s194 = sphi 0, %s192
      %s195 = sphi 0, %s194
      %s209 = sphi 0, %s195
      %s213 = sphi 0, %s213
      %s215 = sphi 0, %s213
      %s216 = sphi 0, %s215
      %s230 = sphi 0, %s216
      %s234 = sphi 0, %s234
      %s236 = sphi 0, %s234
      %s237 = sphi 0, %s236
      %s251 = sphi 0, %s237
      %s255 = sphi 0, %s255
      %s257 = sphi 0, %s255
      %s258 = sphi 0, %s257
      %s272 = sphi 0, %s258
      %s276 = sphi 0, %s276
      %s278 = sphi 0, %s276
      %s279 = sphi 0, %s278
      %s293 = sphi 0, %s279
      %s297 = sphi 0, %s297
      %s299 = sphi 0, %s297
      %s300 = sphi 0, %s299
      %s314 = sphi 0, %s300
      %s318 = sphi 0, %s318
      %s320 = sphi 0, %s318
      %s321 = sphi 0, %s320
      %s335 = sphi 0, %s321
      %s339 = sphi 0, %s339
      %s341 = sphi 0, %s339
      %s342 = sphi 0, %s341
      %s356 = sphi 0, %s342
      %s360 = sphi 0, %s360
      %s362 = sphi 0, %s360
      %s363 = sphi 0, %s362
      %s377 = sphi 0, %s363
      %s381 = sphi 0, %s381
      %s383 = sphi 0, %s381
      %s384 = sphi 0, %s383
      %s398 = sphi 0, %s384
      %s402 = sphi 0, %s402
      %s404 = sphi 0, %s402
      %s405 = sphi 0, %s404
      %s419 = sphi 0, %s405
      %s425 = sphi 0, %s427
      %s428 = sphi 0, %s425
      %s429 = sphi 0, %s428
      %s445 = sphi 0, %s429
    $region4: #{tpu_custom_call.1} parent=1 // loop_header_branch
      %30 = sbr.rel (%p28) target = $region8
    $region5: #{tpu_custom_call.1} parent=1 // loop_body
      %s32 = ssub.s32 %s27, 1
      %s33 = ssub.s32 %s27, 2
      %s34 = sadd.s32 %s27, 1
      %s35 = ssub.s32 %s27, %s34
      %p36 = scmp.eq.s32.totalorder %s35, 0
      %s38 = sadd.s32 %s37, 1
      %s39 = scalar_select %p36, %s37, %s38
      %p42 = pneg %p36
      %p43 = scmp.eq.s32.totalorder %s27, 1
      %p44 = por %p42, %p43
      %p45 = scmp.ne.s32.totalorder %s37, %s40
      %p46 = scmp.eq.s32.totalorder %s27, 0
      %p47 = por %p45, %p46
      %p48 = scmp.ne.s32.totalorder %s37, %s40
      %p49 = scmp.eq.s32.totalorder %s32, 1
      %p50 = por %p48, %p49
      %p51 = scmp.ne.s32.totalorder %s40, %s41
      %p52 = scmp.eq.s32.totalorder %s32, 0
      %p53 = por %p51, %p52
      %p54 = scmp.ne.s32.totalorder %s40, %s41
      %p55 = scmp.eq.s32.totalorder %s33, 1
      %p56 = por %p54, %p55
      %p58 = scmp.ne.s32.totalorder %s41, %s57
      %p59 = scmp.eq.s32.totalorder %s33, 0
      %p60 = por %p58, %p59
      %s61 = ssub.s32 %s27, %s34
      %p62 = scmp.eq.s32.totalorder %s61, 0
      %s64 = sadd.s32 %s63, 1
      %s65 = scalar_select %p62, %s63, %s64
      %p68 = pneg %p62
      %p69 = scmp.eq.s32.totalorder %s27, 1
      %p70 = por %p68, %p69
      %p71 = scmp.ne.s32.totalorder %s63, %s66
      %p72 = scmp.eq.s32.totalorder %s27, 0
      %p73 = por %p71, %p72
      %p74 = scmp.ne.s32.totalorder %s63, %s66
      %p75 = scmp.eq.s32.totalorder %s32, 1
      %p76 = por %p74, %p75
      %p77 = scmp.ne.s32.totalorder %s66, %s67
      %p78 = scmp.eq.s32.totalorder %s32, 0
      %p79 = por %p77, %p78
      %p80 = scmp.ne.s32.totalorder %s66, %s67
      %p81 = scmp.eq.s32.totalorder %s33, 1
      %p82 = por %p80, %p81
      %p84 = scmp.ne.s32.totalorder %s67, %s83
      %p85 = scmp.eq.s32.totalorder %s33, 0
      %p86 = por %p84, %p85
      %s88 = sadd.s32 %s87, 1
      %p91 = scmp.eq.s32.totalorder %s27, 1
      %p92 = scmp.ne.s32.totalorder %s87, %s89
      %p93 = scmp.eq.s32.totalorder %s27, 0
      %p94 = por %p92, %p93
      %p95 = scmp.ne.s32.totalorder %s87, %s89
      %p96 = scmp.eq.s32.totalorder %s32, 1
      %p97 = por %p95, %p96
      %p98 = scmp.ne.s32.totalorder %s89, %s90
      %p99 = scmp.eq.s32.totalorder %s32, 0
      %p100 = por %p98, %p99
      %p101 = scmp.ne.s32.totalorder %s89, %s90
      %p102 = scmp.eq.s32.totalorder %s33, 1
      %p103 = por %p101, %p102
      %p105 = scmp.ne.s32.totalorder %s90, %s104
      %p106 = scmp.eq.s32.totalorder %s33, 0
      %p107 = por %p105, %p106
      %s109 = sadd.s32 %s108, 1
      %p112 = scmp.eq.s32.totalorder %s27, 1
      %p113 = scmp.ne.s32.totalorder %s108, %s110
      %p114 = scmp.eq.s32.totalorder %s27, 0
      %p115 = por %p113, %p114
      %p116 = scmp.ne.s32.totalorder %s108, %s110
      %p117 = scmp.eq.s32.totalorder %s32, 1
      %p118 = por %p116, %p117
      %p119 = scmp.ne.s32.totalorder %s110, %s111
      %p120 = scmp.eq.s32.totalorder %s32, 0
      %p121 = por %p119, %p120
      %p122 = scmp.ne.s32.totalorder %s110, %s111
      %p123 = scmp.eq.s32.totalorder %s33, 1
      %p124 = por %p122, %p123
      %p126 = scmp.ne.s32.totalorder %s111, %s125
      %p127 = scmp.eq.s32.totalorder %s33, 0
      %p128 = por %p126, %p127
      %s130 = sadd.s32 %s129, 1
      %p133 = scmp.eq.s32.totalorder %s27, 1
      %p134 = scmp.ne.s32.totalorder %s129, %s131
      %p135 = scmp.eq.s32.totalorder %s27, 0
      %p136 = por %p134, %p135
      %p137 = scmp.ne.s32.totalorder %s129, %s131
      %p138 = scmp.eq.s32.totalorder %s32, 1
      %p139 = por %p137, %p138
      %p140 = scmp.ne.s32.totalorder %s131, %s132
      %p141 = scmp.eq.s32.totalorder %s32, 0
      %p142 = por %p140, %p141
      %p143 = scmp.ne.s32.totalorder %s131, %s132
      %p144 = scmp.eq.s32.totalorder %s33, 1
      %p145 = por %p143, %p144
      %p147 = scmp.ne.s32.totalorder %s132, %s146
      %p148 = scmp.eq.s32.totalorder %s33, 0
      %p149 = por %p147, %p148
      %s151 = sadd.s32 %s150, 1
      %p154 = scmp.eq.s32.totalorder %s27, 1
      %p155 = scmp.ne.s32.totalorder %s150, %s152
      %p156 = scmp.eq.s32.totalorder %s27, 0
      %p157 = por %p155, %p156
      %p158 = scmp.ne.s32.totalorder %s150, %s152
      %p159 = scmp.eq.s32.totalorder %s32, 1
      %p160 = por %p158, %p159
      %p161 = scmp.ne.s32.totalorder %s152, %s153
      %p162 = scmp.eq.s32.totalorder %s32, 0
      %p163 = por %p161, %p162
      %p164 = scmp.ne.s32.totalorder %s152, %s153
      %p165 = scmp.eq.s32.totalorder %s33, 1
      %p166 = por %p164, %p165
      %p168 = scmp.ne.s32.totalorder %s153, %s167
      %p169 = scmp.eq.s32.totalorder %s33, 0
      %p170 = por %p168, %p169
      %s172 = sadd.s32 %s171, 1
      %p175 = scmp.eq.s32.totalorder %s27, 1
      %p176 = scmp.ne.s32.totalorder %s171, %s173
      %p177 = scmp.eq.s32.totalorder %s27, 0
      %p178 = por %p176, %p177
      %p179 = scmp.ne.s32.totalorder %s171, %s173
      %p180 = scmp.eq.s32.totalorder %s32, 1
      %p181 = por %p179, %p180
      %p182 = scmp.ne.s32.totalorder %s173, %s174
      %p183 = scmp.eq.s32.totalorder %s32, 0
      %p184 = por %p182, %p183
      %p185 = scmp.ne.s32.totalorder %s173, %s174
      %p186 = scmp.eq.s32.totalorder %s33, 1
      %p187 = por %p185, %p186
      %p189 = scmp.ne.s32.totalorder %s174, %s188
      %p190 = scmp.eq.s32.totalorder %s33, 0
      %p191 = por %p189, %p190
      %s193 = sadd.s32 %s192, 1
      %p196 = scmp.eq.s32.totalorder %s27, 1
      %p197 = scmp.ne.s32.totalorder %s192, %s194
      %p198 = scmp.eq.s32.totalorder %s27, 0
      %p199 = por %p197, %p198
      %p200 = scmp.ne.s32.totalorder %s192, %s194
      %p201 = scmp.eq.s32.totalorder %s32, 1
      %p202 = por %p200, %p201
      %p203 = scmp.ne.s32.totalorder %s194, %s195
      %p204 = scmp.eq.s32.totalorder %s32, 0
      %p205 = por %p203, %p204
      %p206 = scmp.ne.s32.totalorder %s194, %s195
      %p207 = scmp.eq.s32.totalorder %s33, 1
      %p208 = por %p206, %p207
      %p210 = scmp.ne.s32.totalorder %s195, %s209
      %p211 = scmp.eq.s32.totalorder %s33, 0
      %p212 = por %p210, %p211
      %s214 = sadd.s32 %s213, 1
      %p217 = scmp.eq.s32.totalorder %s27, 1
      %p218 = scmp.ne.s32.totalorder %s213, %s215
      %p219 = scmp.eq.s32.totalorder %s27, 0
      %p220 = por %p218, %p219
      %p221 = scmp.ne.s32.totalorder %s213, %s215
      %p222 = scmp.eq.s32.totalorder %s32, 1
      %p223 = por %p221, %p222
      %p224 = scmp.ne.s32.totalorder %s215, %s216
      %p225 = scmp.eq.s32.totalorder %s32, 0
      %p226 = por %p224, %p225
      %p227 = scmp.ne.s32.totalorder %s215, %s216
      %p228 = scmp.eq.s32.totalorder %s33, 1
      %p229 = por %p227, %p228
      %p231 = scmp.ne.s32.totalorder %s216, %s230
      %p232 = scmp.eq.s32.totalorder %s33, 0
      %p233 = por %p231, %p232
      %s235 = sadd.s32 %s234, 1
      %p238 = scmp.eq.s32.totalorder %s27, 1
      %p239 = scmp.ne.s32.totalorder %s234, %s236
      %p240 = scmp.eq.s32.totalorder %s27, 0
      %p241 = por %p239, %p240
      %p242 = scmp.ne.s32.totalorder %s234, %s236
      %p243 = scmp.eq.s32.totalorder %s32, 1
      %p244 = por %p242, %p243
      %p245 = scmp.ne.s32.totalorder %s236, %s237
      %p246 = scmp.eq.s32.totalorder %s32, 0
      %p247 = por %p245, %p246
      %p248 = scmp.ne.s32.totalorder %s236, %s237
      %p249 = scmp.eq.s32.totalorder %s33, 1
      %p250 = por %p248, %p249
      %p252 = scmp.ne.s32.totalorder %s237, %s251
      %p253 = scmp.eq.s32.totalorder %s33, 0
      %p254 = por %p252, %p253
      %s256 = sadd.s32 %s255, 1
      %p259 = scmp.eq.s32.totalorder %s27, 1
      %p260 = scmp.ne.s32.totalorder %s255, %s257
      %p261 = scmp.eq.s32.totalorder %s27, 0
      %p262 = por %p260, %p261
      %p263 = scmp.ne.s32.totalorder %s255, %s257
      %p264 = scmp.eq.s32.totalorder %s32, 1
      %p265 = por %p263, %p264
      %p266 = scmp.ne.s32.totalorder %s257, %s258
      %p267 = scmp.eq.s32.totalorder %s32, 0
      %p268 = por %p266, %p267
      %p269 = scmp.ne.s32.totalorder %s257, %s258
      %p270 = scmp.eq.s32.totalorder %s33, 1
      %p271 = por %p269, %p270
      %p273 = scmp.ne.s32.totalorder %s258, %s272
      %p274 = scmp.eq.s32.totalorder %s33, 0
      %p275 = por %p273, %p274
      %s277 = sadd.s32 %s276, 1
      %p280 = scmp.eq.s32.totalorder %s27, 1
      %p281 = scmp.ne.s32.totalorder %s276, %s278
      %p282 = scmp.eq.s32.totalorder %s27, 0
      %p283 = por %p281, %p282
      %p284 = scmp.ne.s32.totalorder %s276, %s278
      %p285 = scmp.eq.s32.totalorder %s32, 1
      %p286 = por %p284, %p285
      %p287 = scmp.ne.s32.totalorder %s278, %s279
      %p288 = scmp.eq.s32.totalorder %s32, 0
      %p289 = por %p287, %p288
      %p290 = scmp.ne.s32.totalorder %s278, %s279
      %p291 = scmp.eq.s32.totalorder %s33, 1
      %p292 = por %p290, %p291
      %p294 = scmp.ne.s32.totalorder %s279, %s293
      %p295 = scmp.eq.s32.totalorder %s33, 0
      %p296 = por %p294, %p295
      %s298 = sadd.s32 %s297, 1
      %p301 = scmp.eq.s32.totalorder %s27, 1
      %p302 = scmp.ne.s32.totalorder %s297, %s299
      %p303 = scmp.eq.s32.totalorder %s27, 0
      %p304 = por %p302, %p303
      %p305 = scmp.ne.s32.totalorder %s297, %s299
      %p306 = scmp.eq.s32.totalorder %s32, 1
      %p307 = por %p305, %p306
      %p308 = scmp.ne.s32.totalorder %s299, %s300
      %p309 = scmp.eq.s32.totalorder %s32, 0
      %p310 = por %p308, %p309
      %p311 = scmp.ne.s32.totalorder %s299, %s300
      %p312 = scmp.eq.s32.totalorder %s33, 1
      %p313 = por %p311, %p312
      %p315 = scmp.ne.s32.totalorder %s300, %s314
      %p316 = scmp.eq.s32.totalorder %s33, 0
      %p317 = por %p315, %p316
      %s319 = sadd.s32 %s318, 1
      %p322 = scmp.eq.s32.totalorder %s27, 1
      %p323 = scmp.ne.s32.totalorder %s318, %s320
      %p324 = scmp.eq.s32.totalorder %s27, 0
      %p325 = por %p323, %p324
      %p326 = scmp.ne.s32.totalorder %s318, %s320
      %p327 = scmp.eq.s32.totalorder %s32, 1
      %p328 = por %p326, %p327
      %p329 = scmp.ne.s32.totalorder %s320, %s321
      %p330 = scmp.eq.s32.totalorder %s32, 0
      %p331 = por %p329, %p330
      %p332 = scmp.ne.s32.totalorder %s320, %s321
      %p333 = scmp.eq.s32.totalorder %s33, 1
      %p334 = por %p332, %p333
      %p336 = scmp.ne.s32.totalorder %s321, %s335
      %p337 = scmp.eq.s32.totalorder %s33, 0
      %p338 = por %p336, %p337
      %s340 = sadd.s32 %s339, 1
      %p343 = scmp.eq.s32.totalorder %s27, 1
      %p344 = scmp.ne.s32.totalorder %s339, %s341
      %p345 = scmp.eq.s32.totalorder %s27, 0
      %p346 = por %p344, %p345
      %p347 = scmp.ne.s32.totalorder %s339, %s341
      %p348 = scmp.eq.s32.totalorder %s32, 1
      %p349 = por %p347, %p348
      %p350 = scmp.ne.s32.totalorder %s341, %s342
      %p351 = scmp.eq.s32.totalorder %s32, 0
      %p352 = por %p350, %p351
      %p353 = scmp.ne.s32.totalorder %s341, %s342
      %p354 = scmp.eq.s32.totalorder %s33, 1
      %p355 = por %p353, %p354
      %p357 = scmp.ne.s32.totalorder %s342, %s356
      %p358 = scmp.eq.s32.totalorder %s33, 0
      %p359 = por %p357, %p358
      %s361 = sadd.s32 %s360, 1
      %p364 = scmp.eq.s32.totalorder %s27, 1
      %p365 = scmp.ne.s32.totalorder %s360, %s362
      %p366 = scmp.eq.s32.totalorder %s27, 0
      %p367 = por %p365, %p366
      %p368 = scmp.ne.s32.totalorder %s360, %s362
      %p369 = scmp.eq.s32.totalorder %s32, 1
      %p370 = por %p368, %p369
      %p371 = scmp.ne.s32.totalorder %s362, %s363
      %p372 = scmp.eq.s32.totalorder %s32, 0
      %p373 = por %p371, %p372
      %p374 = scmp.ne.s32.totalorder %s362, %s363
      %p375 = scmp.eq.s32.totalorder %s33, 1
      %p376 = por %p374, %p375
      %p378 = scmp.ne.s32.totalorder %s363, %s377
      %p379 = scmp.eq.s32.totalorder %s33, 0
      %p380 = por %p378, %p379
      %s382 = sadd.s32 %s381, 1
      %p385 = scmp.eq.s32.totalorder %s27, 1
      %p386 = scmp.ne.s32.totalorder %s381, %s383
      %p387 = scmp.eq.s32.totalorder %s27, 0
      %p388 = por %p386, %p387
      %p389 = scmp.ne.s32.totalorder %s381, %s383
      %p390 = scmp.eq.s32.totalorder %s32, 1
      %p391 = por %p389, %p390
      %p392 = scmp.ne.s32.totalorder %s383, %s384
      %p393 = scmp.eq.s32.totalorder %s32, 0
      %p394 = por %p392, %p393
      %p395 = scmp.ne.s32.totalorder %s383, %s384
      %p396 = scmp.eq.s32.totalorder %s33, 1
      %p397 = por %p395, %p396
      %p399 = scmp.ne.s32.totalorder %s384, %s398
      %p400 = scmp.eq.s32.totalorder %s33, 0
      %p401 = por %p399, %p400
      %s403 = sadd.s32 %s402, 1
      %p406 = scmp.eq.s32.totalorder %s27, 1
      %p407 = scmp.ne.s32.totalorder %s402, %s404
      %p408 = scmp.eq.s32.totalorder %s27, 0
      %p409 = por %p407, %p408
      %p410 = scmp.ne.s32.totalorder %s402, %s404
      %p411 = scmp.eq.s32.totalorder %s32, 1
      %p412 = por %p410, %p411
      %p413 = scmp.ne.s32.totalorder %s404, %s405
      %p414 = scmp.eq.s32.totalorder %s32, 0
      %p415 = por %p413, %p414
      %p416 = scmp.ne.s32.totalorder %s404, %s405
      %p417 = scmp.eq.s32.totalorder %s33, 1
      %p418 = por %p416, %p417
      %p420 = scmp.ne.s32.totalorder %s405, %s419
      %p421 = scmp.eq.s32.totalorder %s33, 0
      %p422 = por %p420, %p421
      %s423 = ssub.s32 %s27, %s34
      %p424 = scmp.eq.s32.totalorder %s423, 0
      %s426 = sadd.s32 %s425, 1
      %s427 = scalar_select %p424, %s425, %s426
      %p430 = pneg %p424
      %p431 = scmp.eq.s32.totalorder %s27, 1
      %p432 = por %p430, %p431
      %p433 = scmp.ne.s32.totalorder %s425, %s428
      %p434 = scmp.eq.s32.totalorder %s27, 0
      %p435 = por %p433, %p434
      %p436 = scmp.ne.s32.totalorder %s425, %s428
      %p437 = scmp.eq.s32.totalorder %s32, 1
      %p438 = por %p436, %p437
      %p439 = scmp.ne.s32.totalorder %s428, %s429
      %p440 = scmp.eq.s32.totalorder %s32, 0
      %p441 = por %p439, %p440
      %p442 = scmp.ne.s32.totalorder %s428, %s429
      %p443 = scmp.eq.s32.totalorder %s33, 1
      %p444 = por %p442, %p443
      %p446 = scmp.ne.s32.totalorder %s429, %s445
      %p447 = scmp.eq.s32.totalorder %s33, 0
      %p448 = por %p446, %p447
      %p449 = scmp.le.s32.totalorder 1, %s27
      %p450 = scmp.lt.s32.totalorder %s27, 3
      %p451 = pnand %p449, %p450
      %p452 = pneg %p451
      // Predicated region
      $region9: #{tpu_custom_call.1} parent=5 // pred_check
        _
      $region10: #{tpu_custom_call.1} parent=5 // pred_check_branch
        %454 = sbr.rel (%p451) target = $region12
      $region11: #{tpu_custom_call.1} parent=5 // pred_region
        %s455 = ssub.s32 %s27, 1
        // Predicated region
        $region13: #{tpu_custom_call.1} parent=11 // pred_check
          %p456 = pneg %p100
        $region14: #{tpu_custom_call.1} parent=11 // pred_check_branch
          %458 = sbr.rel (%p456) target = $region16
        $region15: #{tpu_custom_call.1} parent=11 // pred_region
          _
        $region16: #{tpu_custom_call.1} parent=11 // pred_fallthru
          _
        // Predicated region
        $region17: #{tpu_custom_call.1} parent=11 // pred_check
          %p459 = pneg %p121
        $region18: #{tpu_custom_call.1} parent=11 // pred_check_branch
          %461 = sbr.rel (%p459) target = $region20
        $region19: #{tpu_custom_call.1} parent=11 // pred_region
          _
        $region20: #{tpu_custom_call.1} parent=11 // pred_fallthru
          _
        // Predicated region
        $region21: #{tpu_custom_call.1} parent=11 // pred_check
          %p462 = pneg %p142
        $region22: #{tpu_custom_call.1} parent=11 // pred_check_branch
          %464 = sbr.rel (%p462) target = $region24
        $region23: #{tpu_custom_call.1} parent=11 // pred_region
          _
        $region24: #{tpu_custom_call.1} parent=11 // pred_fallthru
          _
        // Predicated region
        $region25: #{tpu_custom_call.1} parent=11 // pred_check
          %p465 = pneg %p163
        $region26: #{tpu_custom_call.1} parent=11 // pred_check_branch
          %467 = sbr.rel (%p465) target = $region28
        $region27: #{tpu_custom_call.1} parent=11 // pred_region
          _
        $region28: #{tpu_custom_call.1} parent=11 // pred_fallthru
          _
        // Predicated region
        $region29: #{tpu_custom_call.1} parent=11 // pred_check
          %p468 = pneg %p184
        $region30: #{tpu_custom_call.1} parent=11 // pred_check_branch
          %470 = sbr.rel (%p468) target = $region32
        $region31: #{tpu_custom_call.1} parent=11 // pred_region
          _
        $region32: #{tpu_custom_call.1} parent=11 // pred_fallthru
          _
        // Predicated region
        $region33: #{tpu_custom_call.1} parent=11 // pred_check
          %p471 = pneg %p205
        $region34: #{tpu_custom_call.1} parent=11 // pred_check_branch
          %473 = sbr.rel (%p471) target = $region36
        $region35: #{tpu_custom_call.1} parent=11 // pred_region
          _
        $region36: #{tpu_custom_call.1} parent=11 // pred_fallthru
          _
        // Predicated region
        $region37: #{tpu_custom_call.1} parent=11 // pred_check
          %p474 = pneg %p226
        $region38: #{tpu_custom_call.1} parent=11 // pred_check_branch
          %476 = sbr.rel (%p474) target = $region40
        $region39: #{tpu_custom_call.1} parent=11 // pred_region
          _
        $region40: #{tpu_custom_call.1} parent=11 // pred_fallthru
          _
        // Predicated region
        $region41: #{tpu_custom_call.1} parent=11 // pred_check
          %p477 = pneg %p247
        $region42: #{tpu_custom_call.1} parent=11 // pred_check_branch
          %479 = sbr.rel (%p477) target = $region44
        $region43: #{tpu_custom_call.1} parent=11 // pred_region
          _
        $region44: #{tpu_custom_call.1} parent=11 // pred_fallthru
          _
        // Predicated region
        $region45: #{tpu_custom_call.1} parent=11 // pred_check
          %p480 = pneg %p268
        $region46: #{tpu_custom_call.1} parent=11 // pred_check_branch
          %482 = sbr.rel (%p480) target = $region48
        $region47: #{tpu_custom_call.1} parent=11 // pred_region
          _
        $region48: #{tpu_custom_call.1} parent=11 // pred_fallthru
          _
        // Predicated region
        $region49: #{tpu_custom_call.1} parent=11 // pred_check
          %p483 = pneg %p289
        $region50: #{tpu_custom_call.1} parent=11 // pred_check_branch
          %485 = sbr.rel (%p483) target = $region52
        $region51: #{tpu_custom_call.1} parent=11 // pred_region
          _
        $region52: #{tpu_custom_call.1} parent=11 // pred_fallthru
          _
        // Predicated region
        $region53: #{tpu_custom_call.1} parent=11 // pred_check
          %p486 = pneg %p310
        $region54: #{tpu_custom_call.1} parent=11 // pred_check_branch
          %488 = sbr.rel (%p486) target = $region56
        $region55: #{tpu_custom_call.1} parent=11 // pred_region
          _
        $region56: #{tpu_custom_call.1} parent=11 // pred_fallthru
          _
        // Predicated region
        $region57: #{tpu_custom_call.1} parent=11 // pred_check
          %p489 = pneg %p331
        $region58: #{tpu_custom_call.1} parent=11 // pred_check_branch
          %491 = sbr.rel (%p489) target = $region60
        $region59: #{tpu_custom_call.1} parent=11 // pred_region
          _
        $region60: #{tpu_custom_call.1} parent=11 // pred_fallthru
          _
        // Predicated region
        $region61: #{tpu_custom_call.1} parent=11 // pred_check
          %p492 = pneg %p352
        $region62: #{tpu_custom_call.1} parent=11 // pred_check_branch
          %494 = sbr.rel (%p492) target = $region64
        $region63: #{tpu_custom_call.1} parent=11 // pred_region
          _
        $region64: #{tpu_custom_call.1} parent=11 // pred_fallthru
          _
        // Predicated region
        $region65: #{tpu_custom_call.1} parent=11 // pred_check
          %p495 = pneg %p373
        $region66: #{tpu_custom_call.1} parent=11 // pred_check_branch
          %497 = sbr.rel (%p495) target = $region68
        $region67: #{tpu_custom_call.1} parent=11 // pred_region
          _
        $region68: #{tpu_custom_call.1} parent=11 // pred_fallthru
          _
        // Predicated region
        $region69: #{tpu_custom_call.1} parent=11 // pred_check
          %p498 = pneg %p394
        $region70: #{tpu_custom_call.1} parent=11 // pred_check_branch
          %500 = sbr.rel (%p498) target = $region72
        $region71: #{tpu_custom_call.1} parent=11 // pred_region
          _
        $region72: #{tpu_custom_call.1} parent=11 // pred_fallthru
          _
        // Predicated region
        $region73: #{tpu_custom_call.1} parent=11 // pred_check
          %p501 = pneg %p415
        $region74: #{tpu_custom_call.1} parent=11 // pred_check_branch
          %503 = sbr.rel (%p501) target = $region76
        $region75: #{tpu_custom_call.1} parent=11 // pred_region
          _
        $region76: #{tpu_custom_call.1} parent=11 // pred_fallthru
          _
      $region12: #{tpu_custom_call.1} parent=5 // pred_fallthru
        _
      %p504 = scmp.lt.s32.totalorder %s27, 2
      // Predicated region
      $region77: #{tpu_custom_call.1} parent=5 // pred_check
        %p505 = pneg %p504
      $region78: #{tpu_custom_call.1} parent=5 // pred_check_branch
        %507 = sbr.rel (%p505) target = $region80
      $region79: #{tpu_custom_call.1} parent=5 // pred_region
        // Predicated region
        $region81: #{tpu_custom_call.1} parent=79 // pred_check
          %p508 = pneg %p47
        $region82: #{tpu_custom_call.1} parent=79 // pred_check_branch
          %510 = sbr.rel (%p508) target = $region84
        $region83: #{tpu_custom_call.1} parent=79 // pred_region
          %s511 = smul.u32 2, %s27
          %p512 = scmp.lt.s32.totalorder %s511, 3
          %s513 = scalar_select %p512, %s511, 3
          %s514 = smul.addr %s513, 8
          %s515 = scalar_lea.vmem %s0, %s514
          %s516 = smul.u32 2, %s27
        $region84: #{tpu_custom_call.1} parent=79 // pred_fallthru
          _
        // Predicated region
        $region85: #{tpu_custom_call.1} parent=79 // pred_check
          %p517 = pneg %p73
        $region86: #{tpu_custom_call.1} parent=79 // pred_check_branch
          %519 = sbr.rel (%p517) target = $region88
        $region87: #{tpu_custom_call.1} parent=79 // pred_region
          %s520 = smul.u32 2, %s27
          %p521 = scmp.lt.s32.totalorder %s520, 3
          %s522 = scalar_select %p521, %s520, 3
          %s523 = scalar_lea.vmem %s1, %s522
          %s524 = smul.u32 2, %s27
        $region88: #{tpu_custom_call.1} parent=79 // pred_fallthru
          _
      $region80: #{tpu_custom_call.1} parent=5 // pred_fallthru
        _
      %p525 = scmp.le.s32.totalorder 1, %s27
      %p526 = scmp.lt.s32.totalorder %s27, 3
      %p527 = pnand %p525, %p526
      %p528 = pneg %p527
      // Predicated region
      $region89: #{tpu_custom_call.1} parent=5 // pred_check
        _
      $region90: #{tpu_custom_call.1} parent=5 // pred_check_branch
        %530 = sbr.rel (%p527) target = $region92
      $region91: #{tpu_custom_call.1} parent=5 // pred_region
        %s531 = ssub.s32 %s27, 1
        %s532 = smul.u32 2, %s32
        %p533 = scmp.lt.s32.totalorder %s532, 3
        %s534 = scalar_select %p533, %s532, 3
        %s535 = smul.addr %s534, 8
        %s536 = scalar_lea.vmem %s0, %s535
        %p537 = pneg %p53
        %p538 = pneg %p50
        %s539 = smul.u32 2, %s32
        %p540 = scmp.lt.s32.totalorder %s539, 3
        %s541 = scalar_select %p540, %s539, 3
        %s542 = scalar_lea.vmem %s1, %s541
        %p543 = pneg %p79
        %p544 = pneg %p76
        %p545 = pneg %p100
        %p546 = pneg %p97
        %p547 = pneg %p121
        %p548 = pneg %p118
        %p549 = pneg %p142
        %p550 = pneg %p139
        %p551 = pneg %p163
        %p552 = pneg %p160
        %p553 = pneg %p184
        %p554 = pneg %p181
        %p555 = pneg %p205
        %p556 = pneg %p202
        %p557 = pneg %p226
        %p558 = pneg %p223
        %p559 = pneg %p247
        %p560 = pneg %p244
        %p561 = pneg %p268
        %p562 = pneg %p265
        %p563 = pneg %p289
        %p564 = pneg %p286
        %p565 = pneg %p310
        %p566 = pneg %p307
        %p567 = pneg %p331
        %p568 = pneg %p328
        %p569 = pneg %p352
        %p570 = pneg %p349
        %p571 = pneg %p373
        %p572 = pneg %p370
        %p573 = pneg %p394
        %p574 = pneg %p391
        %p575 = pneg %p415
        %p576 = pneg %p412
        %p577 = pneg %p441
        %p578 = pneg %p438
        %s579 = sand.u32 %s428, 1
        %s580 = scalar_lea.sflag [#allocation5], %s579
        %s581 = sand.u32 %s428, 1
        %s582 = smul.addr %s581, 32
        %s583 = scalar_lea.vmem [#allocation4], %s582
        %s584 = smul.u32 2, %s32
        %p585 = scmp.lt.s32.totalorder %s584, 3
        %s586 = scalar_select %p585, %s584, 3
        %s587 = smul.addr %s586, 8
        %s588 = scalar_lea.vmem %s0, %s587
        %s589 = smul.u32 2, %s32
        %s590 = smul.u32 2, %s32
        %p591 = scmp.lt.s32.totalorder %s590, 3
        %s592 = scalar_select %p591, %s590, 3
        %s593 = scalar_lea.vmem %s1, %s592
        %s594 = smul.u32 2, %s32
        %s595 = smul.u32 2, %s32
        %v596 = vld [vmem:[%s588] sm:$0xff]
        %597 = vxpose.xlu0.b32.start [1/16] %v596, 128
        %598 = vxpose.xlu0.b32.cont [2/16] 0.0, 128
        %599 = vxpose.xlu0.b32.cont [3/16] 0.0, 128
        %600 = vxpose.xlu0.b32.cont [4/16] 0.0, 128
        %601 = vxpose.xlu0.b32.cont [5/16] 0.0, 128
        %602 = vxpose.xlu0.b32.cont [6/16] 0.0, 128
        %603 = vxpose.xlu0.b32.cont [7/16] 0.0, 128
        %604 = vxpose.xlu0.b32.cont [8/16] 0.0, 128
        %605 = vxpose.xlu0.b32.cont [9/16] 0.0, 128
        %606 = vxpose.xlu0.b32.cont [10/16] 0.0, 128
        %607 = vxpose.xlu0.b32.cont [11/16] 0.0, 128
        %608 = vxpose.xlu0.b32.cont [12/16] 0.0, 128
        %609 = vxpose.xlu0.b32.cont [13/16] 0.0, 128
        %610 = vxpose.xlu0.b32.cont [14/16] 0.0, 128
        %611 = vxpose.xlu0.b32.cont [15/16] 0.0, 128
        %612 = vxpose.xlu0.b32.end [16/16] 0.0, 128
        %v613 = vpop.trf.xlu0
        %v614 = vpop.trf.xlu0
        %v615 = vpop.trf.xlu0
        %v616 = vpop.trf.xlu0
        %v617 = vpop.trf.xlu0
        %v618 = vpop.trf.xlu0
        %v619 = vpop.trf.xlu0
        %v620 = vpop.trf.xlu0
        %v621 = vpop.trf.xlu0
        %v622 = vpop.trf.xlu0
        %v623 = vpop.trf.xlu0
        %v624 = vpop.trf.xlu0
        %v625 = vpop.trf.xlu0
        %v626 = vpop.trf.xlu0
        %v627 = vpop.trf.xlu0
        %v628 = vpop.trf.xlu0
        %s629 = scalar_lea.vmem %s588, 8
        %v630 = vld [vmem:[%s629] sm:$0xff]
        %631 = vxpose.xlu0.b32.start [1/16] %v630, 128
        %632 = vxpose.xlu0.b32.cont [2/16] 0.0, 128
        %633 = vxpose.xlu0.b32.cont [3/16] 0.0, 128
        %634 = vxpose.xlu0.b32.cont [4/16] 0.0, 128
        %635 = vxpose.xlu0.b32.cont [5/16] 0.0, 128
        %636 = vxpose.xlu0.b32.cont [6/16] 0.0, 128
        %637 = vxpose.xlu0.b32.cont [7/16] 0.0, 128
        %638 = vxpose.xlu0.b32.cont [8/16] 0.0, 128
        %639 = vxpose.xlu0.b32.cont [9/16] 0.0, 128
        %640 = vxpose.xlu0.b32.cont [10/16] 0.0, 128
        %641 = vxpose.xlu0.b32.cont [11/16] 0.0, 128
        %642 = vxpose.xlu0.b32.cont [12/16] 0.0, 128
        %643 = vxpose.xlu0.b32.cont [13/16] 0.0, 128
        %644 = vxpose.xlu0.b32.cont [14/16] 0.0, 128
        %645 = vxpose.xlu0.b32.cont [15/16] 0.0, 128
        %646 = vxpose.xlu0.b32.end [16/16] 0.0, 128
        %v647 = vpop.trf.xlu0
        %v648 = vpop.trf.xlu0
        %v649 = vpop.trf.xlu0
        %v650 = vpop.trf.xlu0
        %v651 = vpop.trf.xlu0
        %v652 = vpop.trf.xlu0
        %v653 = vpop.trf.xlu0
        %v654 = vpop.trf.xlu0
        %v655 = vpop.trf.xlu0
        %v656 = vpop.trf.xlu0
        %v657 = vpop.trf.xlu0
        %v658 = vpop.trf.xlu0
        %v659 = vpop.trf.xlu0
        %v660 = vpop.trf.xlu0
        %v661 = vpop.trf.xlu0
        %v662 = vpop.trf.xlu0
        %v663 = vld [vmem:[%s2] sm:$0xff]
        %v664 = vld [vmem:[%s3] sm:$0x3]
        %v665 = vld [vmem:[%s4] sm:$0x1]
        %v666 = vld [vmem:[%s5] sm:$0x1]
        %vm667 = vcmask 64512
        %v668 = vsel %vm667, %v613, 0.0
        %v669 = vsel %vm667, %v614, 0.0
        %v670 = vadd.f32 %v668, %v669
        %v671 = vrot.slane %v670, 4
        %v672 = vadd.f32 %v670, %v671
        %v673 = vrot.slane %v672, 2
        %v674 = vadd.f32 %v672, %v673
        %v675 = vrot.slane %v674, 1
        %v676 = vadd.f32 %v674, %v675
        %v677 = vsel %vm667, %v647, 0.0
        %v678 = vsel %vm667, %v648, 0.0
        %v679 = vadd.f32 %v677, %v678
        %v680 = vrot.slane %v679, 4
        %v681 = vadd.f32 %v679, %v680
        %v682 = vrot.slane %v681, 2
        %v683 = vadd.f32 %v681, %v682
        %v684 = vrot.slane %v683, 1
        %v685 = vadd.f32 %v683, %v684
        %vm688 = vcmask 1041409
        %v689 = vsel %vm688, %v685, %v676
        %v690 = vsel %vm667, %v689, 0
        %692 = vmatpush.msra.mxu0 0.0
        %693 = vmatpush.msra.mxu0 0.0
        %694 = vmatpush.msra.mxu0 0.0
        %695 = vmatpush.msra.mxu0 0.0
        %696 = vmatpush.msra.mxu0 0.0
        %697 = vmatpush.msra.mxu0 0.0
        %698 = vmatpush.msra.mxu0 0.0
        %699 = vmatpush.msra.mxu0 0.0
        %700 = vmatpush.msra.mxu0 0.0
        %701 = vmatpush.msra.mxu0 0.0
        %702 = vmatpush.msra.mxu0 0.0
        %703 = vmatpush.msra.mxu0 0.0
        %704 = vmatpush.msra.mxu0 0.0
        %705 = vmatpush.msra.mxu0 0.0
        %706 = vmatpush.msra.mxu0 0.0
        %707 = vmatpush.msra.mxu0 %v663
        %708 = vmatmul.f32.gmra.mxu0 %v690
        %v709 = vpop.f32.mrf.mxu0
        %v710 = vadd.f32 0.0, %v709
        %711 = vdwg.mxu0
        %v712 = vmul.f32 %v710, 0.015625
        %vm713 = vcmask 15360
        %v715 = vsel %vm713, %v712, 0
        %vm717 = vcmask 1041408
        %v719 = vsel %vm717, %v664, 0
        %721 = vmatpush.msra.mxu0 0.0
        %722 = vmatpush.msra.mxu0 0.0
        %723 = vmatpush.msra.mxu0 0.0
        %724 = vmatpush.msra.mxu0 0.0
        %725 = vmatpush.msra.mxu0 0.0
        %726 = vmatpush.msra.mxu0 0.0
        %727 = vmatpush.msra.mxu0 0.0
        %728 = vmatpush.msra.mxu0 0.0
        %729 = vmatpush.msra.mxu0 0.0
        %730 = vmatpush.msra.mxu0 0.0
        %731 = vmatpush.msra.mxu0 0.0
        %732 = vmatpush.msra.mxu0 0.0
        %733 = vmatpush.msra.mxu0 0.0
        %734 = vmatpush.msra.mxu0 0.0
        %735 = vmatpush.msra.mxu0 0.0
        %736 = vmatpush.msra.mxu0 %v719
        %737 = vmatmul.f32.gmra.mxu0 %v715
        %v738 = vpop.f32.mrf.mxu0
        %v739 = vadd.f32 0.0, %v738
        %740 = vdwg.mxu0
        %v742 = vrot.slane %v739, 1
        %v743 = vperm.slane %v739, 0
        %v744 = vperm.slane %v742, 0
        %v747 = vsub.f32 %v613, %v743
        %v748 = vsub.f32 %v614, %v743
        %v749 = vsub.f32 %v647, %v744
        %v750 = vsub.f32 %v648, %v744
        %v751 = vmul.f32 %v747, %v747
        %v752 = vmul.f32 %v748, %v748
        %v753 = vmul.f32 %v749, %v749
        %v754 = vmul.f32 %v750, %v750
        %v755 = vsel %vm667, %v751, 0.0
        %v756 = vsel %vm667, %v752, 0.0
        %v757 = vadd.f32 %v755, %v756
        %v758 = vrot.slane %v757, 4
        %v759 = vadd.f32 %v757, %v758
        %v760 = vrot.slane %v759, 2
        %v761 = vadd.f32 %v759, %v760
        %v762 = vrot.slane %v761, 1
        %v763 = vadd.f32 %v761, %v762
        %v764 = vsel %vm667, %v753, 0.0
        %v765 = vsel %vm667, %v754, 0.0
        %v766 = vadd.f32 %v764, %v765
        %v767 = vrot.slane %v766, 4
        %v768 = vadd.f32 %v766, %v767
        %v769 = vrot.slane %v768, 2
        %v770 = vadd.f32 %v768, %v769
        %v771 = vrot.slane %v770, 1
        %v772 = vadd.f32 %v770, %v771
        %v775 = vsel %vm688, %v772, %v763
        %v776 = vsel %vm667, %v775, 0
        %778 = vmatpush.msra.mxu0 0.0
        %779 = vmatpush.msra.mxu0 0.0
        %780 = vmatpush.msra.mxu0 0.0
        %781 = vmatpush.msra.mxu0 0.0
        %782 = vmatpush.msra.mxu0 0.0
        %783 = vmatpush.msra.mxu0 0.0
        %784 = vmatpush.msra.mxu0 0.0
        %785 = vmatpush.msra.mxu0 0.0
        %786 = vmatpush.msra.mxu0 0.0
        %787 = vmatpush.msra.mxu0 0.0
        %788 = vmatpush.msra.mxu0 0.0
        %789 = vmatpush.msra.mxu0 0.0
        %790 = vmatpush.msra.mxu0 0.0
        %791 = vmatpush.msra.mxu0 0.0
        %792 = vmatpush.msra.mxu0 0.0
        %793 = vmatpush.msra.mxu0 %v663
        %794 = vmatmul.f32.gmra.mxu0 %v776
        %v795 = vpop.f32.mrf.mxu0
        %v796 = vadd.f32 0.0, %v795
        %797 = vdwg.mxu0
        %v798 = vmul.f32 %v796, 0.015625
        %v800 = vsel %vm713, %v798, 0
        %802 = vmatpush.msra.mxu0 0.0
        %803 = vmatpush.msra.mxu0 0.0
        %804 = vmatpush.msra.mxu0 0.0
        %805 = vmatpush.msra.mxu0 0.0
        %806 = vmatpush.msra.mxu0 0.0
        %807 = vmatpush.msra.mxu0 0.0
        %808 = vmatpush.msra.mxu0 0.0
        %809 = vmatpush.msra.mxu0 0.0
        %810 = vmatpush.msra.mxu0 0.0
        %811 = vmatpush.msra.mxu0 0.0
        %812 = vmatpush.msra.mxu0 0.0
        %813 = vmatpush.msra.mxu0 0.0
        %814 = vmatpush.msra.mxu0 0.0
        %815 = vmatpush.msra.mxu0 0.0
        %816 = vmatpush.msra.mxu0 0.0
        %817 = vmatpush.msra.mxu0 %v719
        %818 = vmatmul.f32.gmra.mxu0 %v800
        %v819 = vpop.f32.mrf.mxu0
        %v820 = vadd.f32 0.0, %v819
        %821 = vdwg.mxu0
        %v823 = vrot.slane %v820, 1
        %v825 = vadd.f32 %v820, 1e-05
        %v826 = vadd.f32 %v823, 1e-05
        %v827 = vrsqrt.pop %v825
        %v828 = vmul.f32 %v827, %v825
        %v829 = vmul.f32 %v828, %v827
        %v830 = vmul.f32 0.5, %v829
        %v831 = vsub.f32 1.5, %v830
        %v832 = vmul.f32 %v827, %v831
        %vm833 = vweird.f32 %v825
        %vm834 = vweird.f32 %v827
        %vm835 = vmor %vm833, %vm834
        %v836 = vsel %vm835, %v827, %v832
        %v837 = vrsqrt.pop %v826
        %v838 = vmul.f32 %v837, %v826
        %v839 = vmul.f32 %v838, %v837
        %v840 = vmul.f32 0.5, %v839
        %v841 = vsub.f32 1.5, %v840
        %v842 = vmul.f32 %v837, %v841
        %vm843 = vweird.f32 %v826
        %vm844 = vweird.f32 %v837
        %vm845 = vmor %vm843, %vm844
        %v846 = vsel %vm845, %v837, %v842
        %v849 = vperm.slane %v836, 0
        %v850 = vperm.slane %v846, 0
        %v853 = vmul.f32 %v747, %v849
        %v854 = vmul.f32 %v748, %v849
        %v855 = vmul.f32 %v749, %v850
        %v856 = vmul.f32 %v750, %v850
        %v858 = vperm.slane %v665, 0
        %v860 = vmul.f32 %v853, %v858
        %v861 = vmul.f32 %v854, %v858
        %v862 = vmul.f32 %v855, %v858
        %v863 = vmul.f32 %v856, %v858
        %v865 = vperm.slane %v666, 0
        %v867 = vadd.f32 %v860, %v865
        %v868 = vadd.f32 %v861, %v865
        %v869 = vadd.f32 %v862, %v865
        %v870 = vadd.f32 %v863, %v865
        %v871 = vxor.u32 %v867, 2147483648
        %v872 = vxor.u32 %v868, 2147483648
        %v873 = vxor.u32 %v869, 2147483648
        %v874 = vxor.u32 %v870, 2147483648
        %v875 = vmul.f32 %v871, 1.442695
        %v876 = vpow.pop %v875
        %v877 = vmul.f32 %v872, 1.442695
        %v878 = vpow.pop %v877
        %v879 = vmul.f32 %v873, 1.442695
        %v880 = vpow.pop %v879
        %v881 = vmul.f32 %v874, 1.442695
        %v882 = vpow.pop %v881
        %v883 = vadd.f32 %v876, 1.0
        %v884 = vadd.f32 %v878, 1.0
        %v885 = vadd.f32 %v880, 1.0
        %v886 = vadd.f32 %v882, 1.0
        %v887 = vrcp.pop %v883
        %v888 = vmul.f32 %v883, %v887
        %v889 = vsub.f32 1.0, %v888
        %v890 = vmul.f32 %v887, %v889
        %v891 = vadd.f32 %v887, %v890
        %vm892 = vweird.f32 %v883
        %vm893 = vweird.f32 %v887
        %vm894 = vmor %vm892, %vm893
        %v895 = vsel %vm894, %v887, %v891
        %v896 = vand.u32 2147483647, %v883
        %vm897 = vcmp.eq.f32.partialorder %v896, 8.507059e+37
        %v898 = vand.u32 %v883, 2147483648
        %v899 = vor.u32 1.1754944e-38, %v898
        %v900 = vsel %vm897, %v899, %v895
        %v901 = vmul.f32 1.0, %v900
        %v902 = vrcp.pop %v884
        %v903 = vmul.f32 %v884, %v902
        %v904 = vsub.f32 1.0, %v903
        %v905 = vmul.f32 %v902, %v904
        %v906 = vadd.f32 %v902, %v905
        %vm907 = vweird.f32 %v884
        %vm908 = vweird.f32 %v902
        %vm909 = vmor %vm907, %vm908
        %v910 = vsel %vm909, %v902, %v906
        %v911 = vand.u32 2147483647, %v884
        %vm912 = vcmp.eq.f32.partialorder %v911, 8.507059e+37
        %v913 = vand.u32 %v884, 2147483648
        %v914 = vor.u32 1.1754944e-38, %v913
        %v915 = vsel %vm912, %v914, %v910
        %v916 = vmul.f32 1.0, %v915
        %v917 = vrcp.pop %v885
        %v918 = vmul.f32 %v885, %v917
        %v919 = vsub.f32 1.0, %v918
        %v920 = vmul.f32 %v917, %v919
        %v921 = vadd.f32 %v917, %v920
        %vm922 = vweird.f32 %v885
        %vm923 = vweird.f32 %v917
        %vm924 = vmor %vm922, %vm923
        %v925 = vsel %vm924, %v917, %v921
        %v926 = vand.u32 2147483647, %v885
        %vm927 = vcmp.eq.f32.partialorder %v926, 8.507059e+37
        %v928 = vand.u32 %v885, 2147483648
        %v929 = vor.u32 1.1754944e-38, %v928
        %v930 = vsel %vm927, %v929, %v925
        %v931 = vmul.f32 1.0, %v930
        %v932 = vrcp.pop %v886
        %v933 = vmul.f32 %v886, %v932
        %v934 = vsub.f32 1.0, %v933
        %v935 = vmul.f32 %v932, %v934
        %v936 = vadd.f32 %v932, %v935
        %vm937 = vweird.f32 %v886
        %vm938 = vweird.f32 %v932
        %vm939 = vmor %vm937, %vm938
        %v940 = vsel %vm939, %v932, %v936
        %v941 = vand.u32 2147483647, %v886
        %vm942 = vcmp.eq.f32.partialorder %v941, 8.507059e+37
        %v943 = vand.u32 %v886, 2147483648
        %v944 = vor.u32 1.1754944e-38, %v943
        %v945 = vsel %vm942, %v944, %v940
        %v946 = vmul.f32 1.0, %v945
        %v947 = vmul.f32 %v867, %v901
        %v948 = vmul.f32 %v868, %v916
        %v949 = vmul.f32 %v869, %v931
        %v950 = vmul.f32 %v870, %v946
        %v951 = vld [vmem:[%s7] sm:$0x1]
        %956 = vrot.lane.b32.xlu0 %v947, 8
        %v957 = vpop.permute.xlu0 %956
        %958 = vrot.lane.b32.xlu0 %v948, 8
        %v959 = vpop.permute.xlu0 %958
        %960 = vrot.lane.b32.xlu0 %v949, 8
        %v961 = vpop.permute.xlu0 %960
        %962 = vrot.lane.b32.xlu0 %v950, 8
        %v963 = vpop.permute.xlu0 %962
        %vm968 = vcmask 130112
        %969 = vst.msk [vmem:[#allocation2] sm:$0xff] %vm968, %v957
        %970 = vst.msk [vmem:[#allocation2 + $0x8] sm:$0xff] %vm968, %v959
        %971 = vst.msk [vmem:[#allocation2 + $0x10] sm:$0xff] %vm968, %v961
        %972 = vst.msk [vmem:[#allocation2 + $0x18] sm:$0xff] %vm968, %v963
        %vm973 = vcmask 57344
        %974 = vst.msk [vmem:[#allocation2] sm:$0x1] %vm973, 0.0
        %975 = vst.msk [vmem:[#allocation2 + $0x10] sm:$0x1] %vm973, 0.0
        %976 = vst.msk [vmem:[#allocation2 + $0x1] sm:$0xff] %vm667, %v947
        %vm977 = vcmask 63488
        %978 = vst.msk [vmem:[#allocation2 + $0x9] sm:$0x7f] %vm977, %v948
        %979 = vst.msk [vmem:[#allocation2 + $0x11] sm:$0xff] %vm667, %v949
        %980 = vst.msk [vmem:[#allocation2 + $0x19] sm:$0x7f] %vm977, %v950
        %vm981 = vcmask 188544
        %982 = vst.msk [vmem:[#allocation2 + $0xf] sm:$0x1] %vm981, 0.0
        %983 = vst.msk [vmem:[#allocation2 + $0x1f] sm:$0x1] %vm981, 0.0
        %984 = vrot.lane.b32.xlu0 %v947, 16
        %v985 = vpop.permute.xlu0 %984
        %986 = vrot.lane.b32.xlu0 %v948, 16
        %v987 = vpop.permute.xlu0 %986
        %988 = vrot.lane.b32.xlu0 %v949, 16
        %v989 = vpop.permute.xlu0 %988
        %990 = vrot.lane.b32.xlu0 %v950, 16
        %v991 = vpop.permute.xlu0 %990
        %vm996 = vcmask 195713
        %997 = vst.msk [vmem:[#allocation2 - $0x1] sm:$0xfe] %vm996, %v985
        %vm998 = vcmask 195712
        %999 = vst.msk [vmem:[#allocation2 + $0x7] sm:$0xff] %vm998, %v987
        %1000 = vst.msk [vmem:[#allocation2 + $0xf] sm:$0xfe] %vm996, %v989
        %1001 = vst.msk [vmem:[#allocation2 + $0x17] sm:$0xff] %vm998, %v991
        %v1002 = vld [vmem:[#allocation2] sm:$0xff]
        %v1003 = vld [vmem:[#allocation2 + $0x8] sm:$0xff]
        %v1004 = vld [vmem:[#allocation2 + $0x10] sm:$0xff]
        %v1005 = vld [vmem:[#allocation2 + $0x18] sm:$0xff]
        %v1006 = vld [vmem:[%s6] sm:$0xff]
        %v1007 = vld [vmem:[%s6 + $0x8] sm:$0xff]
        %v1008 = vld [vmem:[%s6 + $0x10] sm:$0xff]
        %v1010 = vperm.slane %v951, 0
        %vm1012 = vcmask 195584
        %v1014 = vsel %vm1012, %v1002, 0
        %v1017 = vsel %vm1012, %v1003, 0
        %v1020 = vsel %vm1012, %v1004, 0
        %v1023 = vsel %vm1012, %v1005, 0
        %1025 = vmatpush.msra.mxu0 0.0
        %1026 = vmatpush.msra.mxu0 0.0
        %1027 = vmatpush.msra.mxu0 0.0
        %1028 = vmatpush.msra.mxu0 0.0
        %1029 = vmatpush.msra.mxu0 0.0
        %1030 = vmatpush.msra.mxu0 0.0
        %1031 = vmatpush.msra.mxu0 0.0
        %1032 = vmatpush.msra.mxu0 0.0
        %1033 = vmatpush.msra.mxu0 0.0
        %1034 = vmatpush.msra.mxu0 0.0
        %1035 = vmatpush.msra.mxu0 0.0
        %1036 = vmatpush.msra.mxu0 0.0
        %1037 = vmatpush.msra.mxu0 0.0
        %1038 = vmatpush.msra.mxu0 %v1008
        %1039 = vmatpush.msra.mxu0 %v1007
        %1040 = vmatpush.msra.mxu0 %v1006
        %1041 = vmatmul.f32.gmra.mxu0 %v1014
        %v1042 = vpop.f32.mrf.mxu0
        %v1043 = vadd.f32 %v1010, %v1042
        %1044 = vmatmul.f32.gmra.mxu0 %v1017
        %v1045 = vpop.f32.mrf.mxu0
        %v1046 = vadd.f32 %v1010, %v1045
        %1047 = vmatmul.f32.gmra.mxu0 %v1020
        %v1048 = vpop.f32.mrf.mxu0
        %v1049 = vadd.f32 %v1010, %v1048
        %1050 = vmatmul.f32.gmra.mxu0 %v1023
        %v1051 = vpop.f32.mrf.mxu0
        %v1052 = vadd.f32 %v1010, %v1051
        %1053 = vdwg.mxu0
        %v1054 = vld [vmem:[%s593] sm:$0x1]
        %v1055 = vld [vmem:[%s593 + $0x1] sm:$0x1]
        %v1056 = vld [vmem:[%s8] sm:$0xff]
        %v1057 = vld [vmem:[%s8 + $0x8] sm:$0xff]
        %v1058 = vld [vmem:[%s8 + $0x10] sm:$0xff]
        %v1059 = vld [vmem:[%s8 + $0x18] sm:$0xff]
        %v1060 = vld [vmem:[%s9] sm:$0x1]
        %v1062 = vperm.slane %v1060, 0
        %1066 = vst [vmem:[#allocation1] ss:$9 sm:$0xff] %v1054
        %s1067 = scalar_lea.vmem [#allocation1], 1
        %1068 = vst [vmem:[%s1067] ss:$9 sm:$0xff] %v1055
        %v1069 = vld [vmem:[#allocation1] sm:$0xff]
        %vm1070 = vcmask 261120
        %v1071 = vsel %vm1070, %v1069, 0
        %1073 = vmatpush.msra.mxu0 0.0
        %1074 = vmatpush.msra.mxu0 0.0
        %1075 = vmatpush.msra.mxu0 0.0
        %1076 = vmatpush.msra.mxu0 0.0
        %1077 = vmatpush.msra.mxu0 0.0
        %1078 = vmatpush.msra.mxu0 0.0
        %1079 = vmatpush.msra.mxu0 0.0
        %1080 = vmatpush.msra.mxu0 0.0
        %1081 = vmatpush.msra.mxu0 0.0
        %1082 = vmatpush.msra.mxu0 0.0
        %1083 = vmatpush.msra.mxu0 0.0
        %1084 = vmatpush.msra.mxu0 0.0
        %1085 = vmatpush.msra.mxu0 %v1059
        %1086 = vmatpush.msra.mxu0 %v1058
        %1087 = vmatpush.msra.mxu0 %v1057
        %1088 = vmatpush.msra.mxu0 %v1056
        %1089 = vmatmul.f32.gmra.mxu0 %v1071
        %v1090 = vpop.f32.mrf.mxu0
        %v1091 = vadd.f32 %v1062, %v1090
        %1092 = vdwg.mxu0
        %v1093 = vld [vmem:[%s10] sm:$0xff]
        %v1094 = vld [vmem:[%s10 + $0x8] sm:$0xff]
        %v1095 = vld [vmem:[%s11] sm:$0xf]
        %v1096 = vld [vmem:[%s12] sm:$0x1]
        %v1097 = vld [vmem:[%s13] sm:$0x1]
        %vm1098 = vcmask 130048
        %v1099 = vsel %vm1098, %v1043, 0.0
        %v1100 = vsel %vm1098, %v1046, 0.0
        %v1101 = vadd.f32 %v1099, %v1100
        %v1102 = vrot.slane %v1101, 4
        %v1103 = vadd.f32 %v1101, %v1102
        %v1104 = vrot.slane %v1103, 2
        %v1105 = vadd.f32 %v1103, %v1104
        %v1106 = vrot.slane %v1105, 1
        %v1107 = vadd.f32 %v1105, %v1106
        %v1108 = vsel %vm1098, %v1049, 0.0
        %v1109 = vsel %vm1098, %v1052, 0.0
        %v1110 = vadd.f32 %v1108, %v1109
        %v1111 = vrot.slane %v1110, 4
        %v1112 = vadd.f32 %v1110, %v1111
        %v1113 = vrot.slane %v1112, 2
        %v1114 = vadd.f32 %v1112, %v1113
        %v1115 = vrot.slane %v1114, 1
        %v1116 = vadd.f32 %v1114, %v1115
        %v1119 = vsel %vm688, %v1116, %v1107
        %v1120 = vsel %vm1098, %v1119, 0
        %1122 = vmatpush.msra.mxu0 0.0
        %1123 = vmatpush.msra.mxu0 0.0
        %1124 = vmatpush.msra.mxu0 0.0
        %1125 = vmatpush.msra.mxu0 0.0
        %1126 = vmatpush.msra.mxu0 0.0
        %1127 = vmatpush.msra.mxu0 0.0
        %1128 = vmatpush.msra.mxu0 0.0
        %1129 = vmatpush.msra.mxu0 0.0
        %1130 = vmatpush.msra.mxu0 0.0
        %1131 = vmatpush.msra.mxu0 0.0
        %1132 = vmatpush.msra.mxu0 0.0
        %1133 = vmatpush.msra.mxu0 0.0
        %1134 = vmatpush.msra.mxu0 0.0
        %1135 = vmatpush.msra.mxu0 0.0
        %1136 = vmatpush.msra.mxu0 %v1094
        %1137 = vmatpush.msra.mxu0 %v1093
        %1138 = vmatmul.f32.gmra.mxu0 %v1120
        %v1139 = vpop.f32.mrf.mxu0
        %v1140 = vadd.f32 0.0, %v1139
        %1141 = vdwg.mxu0
        %v1142 = vmul.f32 %v1140, 0.015625
        %vm1143 = vcmask 31744
        %v1145 = vsel %vm1143, %v1142, 0
        %vm1147 = vcmask 1043456
        %v1149 = vsel %vm1147, %v1095, 0
        %1151 = vmatpush.msra.mxu0 0.0
        %1152 = vmatpush.msra.mxu0 0.0
        %1153 = vmatpush.msra.mxu0 0.0
        %1154 = vmatpush.msra.mxu0 0.0
        %1155 = vmatpush.msra.mxu0 0.0
        %1156 = vmatpush.msra.mxu0 0.0
        %1157 = vmatpush.msra.mxu0 0.0
        %1158 = vmatpush.msra.mxu0 0.0
        %1159 = vmatpush.msra.mxu0 0.0
        %1160 = vmatpush.msra.mxu0 0.0
        %1161 = vmatpush.msra.mxu0 0.0
        %1162 = vmatpush.msra.mxu0 0.0
        %1163 = vmatpush.msra.mxu0 0.0
        %1164 = vmatpush.msra.mxu0 0.0
        %1165 = vmatpush.msra.mxu0 0.0
        %1166 = vmatpush.msra.mxu0 %v1149
        %1167 = vmatmul.f32.gmra.mxu0 %v1145
        %v1168 = vpop.f32.mrf.mxu0
        %v1169 = vadd.f32 0.0, %v1168
        %1170 = vdwg.mxu0
        %v1172 = vrot.slane %v1169, 1
        %v1173 = vperm.slane %v1169, 0
        %v1174 = vperm.slane %v1172, 0
        %v1177 = vsub.f32 %v1043, %v1173
        %v1178 = vsub.f32 %v1046, %v1173
        %v1179 = vsub.f32 %v1049, %v1174
        %v1180 = vsub.f32 %v1052, %v1174
        %v1181 = vmul.f32 %v1177, %v1177
        %v1182 = vmul.f32 %v1178, %v1178
        %v1183 = vmul.f32 %v1179, %v1179
        %v1184 = vmul.f32 %v1180, %v1180
        %v1185 = vsel %vm1098, %v1181, 0.0
        %v1186 = vsel %vm1098, %v1182, 0.0
        %v1187 = vadd.f32 %v1185, %v1186
        %v1188 = vrot.slane %v1187, 4
        %v1189 = vadd.f32 %v1187, %v1188
        %v1190 = vrot.slane %v1189, 2
        %v1191 = vadd.f32 %v1189, %v1190
        %v1192 = vrot.slane %v1191, 1
        %v1193 = vadd.f32 %v1191, %v1192
        %v1194 = vsel %vm1098, %v1183, 0.0
        %v1195 = vsel %vm1098, %v1184, 0.0
        %v1196 = vadd.f32 %v1194, %v1195
        %v1197 = vrot.slane %v1196, 4
        %v1198 = vadd.f32 %v1196, %v1197
        %v1199 = vrot.slane %v1198, 2
        %v1200 = vadd.f32 %v1198, %v1199
        %v1201 = vrot.slane %v1200, 1
        %v1202 = vadd.f32 %v1200, %v1201
        %v1205 = vsel %vm688, %v1202, %v1193
        %v1206 = vsel %vm1098, %v1205, 0
        %1208 = vmatpush.msra.mxu0 0.0
        %1209 = vmatpush.msra.mxu0 0.0
        %1210 = vmatpush.msra.mxu0 0.0
        %1211 = vmatpush.msra.mxu0 0.0
        %1212 = vmatpush.msra.mxu0 0.0
        %1213 = vmatpush.msra.mxu0 0.0
        %1214 = vmatpush.msra.mxu0 0.0
        %1215 = vmatpush.msra.mxu0 0.0
        %1216 = vmatpush.msra.mxu0 0.0
        %1217 = vmatpush.msra.mxu0 0.0
        %1218 = vmatpush.msra.mxu0 0.0
        %1219 = vmatpush.msra.mxu0 0.0
        %1220 = vmatpush.msra.mxu0 0.0
        %1221 = vmatpush.msra.mxu0 0.0
        %1222 = vmatpush.msra.mxu0 %v1094
        %1223 = vmatpush.msra.mxu0 %v1093
        %1224 = vmatmul.f32.gmra.mxu0 %v1206
        %v1225 = vpop.f32.mrf.mxu0
        %v1226 = vadd.f32 0.0, %v1225
        %1227 = vdwg.mxu0
        %v1228 = vmul.f32 %v1226, 0.015625
        %v1230 = vsel %vm1143, %v1228, 0
        %1232 = vmatpush.msra.mxu0 0.0
        %1233 = vmatpush.msra.mxu0 0.0
        %1234 = vmatpush.msra.mxu0 0.0
        %1235 = vmatpush.msra.mxu0 0.0
        %1236 = vmatpush.msra.mxu0 0.0
        %1237 = vmatpush.msra.mxu0 0.0
        %1238 = vmatpush.msra.mxu0 0.0
        %1239 = vmatpush.msra.mxu0 0.0
        %1240 = vmatpush.msra.mxu0 0.0
        %1241 = vmatpush.msra.mxu0 0.0
        %1242 = vmatpush.msra.mxu0 0.0
        %1243 = vmatpush.msra.mxu0 0.0
        %1244 = vmatpush.msra.mxu0 0.0
        %1245 = vmatpush.msra.mxu0 0.0
        %1246 = vmatpush.msra.mxu0 0.0
        %1247 = vmatpush.msra.mxu0 %v1149
        %1248 = vmatmul.f32.gmra.mxu0 %v1230
        %v1249 = vpop.f32.mrf.mxu0
        %v1250 = vadd.f32 0.0, %v1249
        %1251 = vdwg.mxu0
        %v1253 = vrot.slane %v1250, 1
        %v1255 = vadd.f32 %v1250, 1e-05
        %v1256 = vadd.f32 %v1253, 1e-05
        %v1257 = vrsqrt.pop %v1255
        %v1258 = vmul.f32 %v1257, %v1255
        %v1259 = vmul.f32 %v1258, %v1257
        %v1260 = vmul.f32 0.5, %v1259
        %v1261 = vsub.f32 1.5, %v1260
        %v1262 = vmul.f32 %v1257, %v1261
        %vm1263 = vweird.f32 %v1255
        %vm1264 = vweird.f32 %v1257
        %vm1265 = vmor %vm1263, %vm1264
        %v1266 = vsel %vm1265, %v1257, %v1262
        %v1267 = vrsqrt.pop %v1256
        %v1268 = vmul.f32 %v1267, %v1256
        %v1269 = vmul.f32 %v1268, %v1267
        %v1270 = vmul.f32 0.5, %v1269
        %v1271 = vsub.f32 1.5, %v1270
        %v1272 = vmul.f32 %v1267, %v1271
        %vm1273 = vweird.f32 %v1256
        %vm1274 = vweird.f32 %v1267
        %vm1275 = vmor %vm1273, %vm1274
        %v1276 = vsel %vm1275, %v1267, %v1272
        %v1279 = vperm.slane %v1266, 0
        %v1280 = vperm.slane %v1276, 0
        %v1283 = vmul.f32 %v1177, %v1279
        %v1284 = vmul.f32 %v1178, %v1279
        %v1285 = vmul.f32 %v1179, %v1280
        %v1286 = vmul.f32 %v1180, %v1280
        %v1288 = vperm.slane %v1096, 0
        %v1290 = vmul.f32 %v1283, %v1288
        %v1291 = vmul.f32 %v1284, %v1288
        %v1292 = vmul.f32 %v1285, %v1288
        %v1293 = vmul.f32 %v1286, %v1288
        %v1295 = vperm.slane %v1097, 0
        %v1297 = vadd.f32 %v1290, %v1295
        %v1298 = vadd.f32 %v1291, %v1295
        %v1299 = vadd.f32 %v1292, %v1295
        %v1300 = vadd.f32 %v1293, %v1295
        %v1302 = vrot.slane %v1091, 1
        %v1304 = vadd.f32 %v1091, 1.0
        %v1305 = vadd.f32 %v1302, 1.0
        %v1308 = vperm.slane %v1304, 0
        %v1309 = vperm.slane %v1305, 0
        %v1312 = vmul.f32 %v1297, %v1308
        %v1313 = vmul.f32 %v1298, %v1308
        %v1314 = vmul.f32 %v1299, %v1309
        %v1315 = vmul.f32 %v1300, %v1309
        %v1316 = vperm.slane %v1091, 0
        %v1317 = vperm.slane %v1302, 0
        %1324 = vrot.lane.b32.xlu0 %v1312, 16
        %v1325 = vpop.permute.xlu0 %1324
        %1326 = vrot.lane.b32.xlu0 %v1313, 16
        %v1327 = vpop.permute.xlu0 %1326
        %1328 = vrot.lane.b32.xlu0 %v1314, 16
        %v1329 = vpop.permute.xlu0 %1328
        %1330 = vrot.lane.b32.xlu0 %v1315, 16
        %v1331 = vpop.permute.xlu0 %1330
        %v1336 = vadd.f32 %v1316, %v1325
        %v1337 = vadd.f32 %v1316, %v1327
        %v1338 = vadd.f32 %v1317, %v1329
        %v1339 = vadd.f32 %v1317, %v1331
        %v1340 = vxor.u32 %v1336, 2147483648
        %v1341 = vxor.u32 %v1337, 2147483648
        %v1342 = vxor.u32 %v1338, 2147483648
        %v1343 = vxor.u32 %v1339, 2147483648
        %v1344 = vmul.f32 %v1340, 1.442695
        %v1345 = vpow.pop %v1344
        %v1346 = vmul.f32 %v1341, 1.442695
        %v1347 = vpow.pop %v1346
        %v1348 = vmul.f32 %v1342, 1.442695
        %v1349 = vpow.pop %v1348
        %v1350 = vmul.f32 %v1343, 1.442695
        %v1351 = vpow.pop %v1350
        %v1352 = vadd.f32 %v1345, 1.0
        %v1353 = vadd.f32 %v1347, 1.0
        %v1354 = vadd.f32 %v1349, 1.0
        %v1355 = vadd.f32 %v1351, 1.0
        %v1356 = vrcp.pop %v1352
        %v1357 = vmul.f32 %v1352, %v1356
        %v1358 = vsub.f32 1.0, %v1357
        %v1359 = vmul.f32 %v1356, %v1358
        %v1360 = vadd.f32 %v1356, %v1359
        %vm1361 = vweird.f32 %v1352
        %vm1362 = vweird.f32 %v1356
        %vm1363 = vmor %vm1361, %vm1362
        %v1364 = vsel %vm1363, %v1356, %v1360
        %v1365 = vand.u32 2147483647, %v1352
        %vm1366 = vcmp.eq.f32.partialorder %v1365, 8.507059e+37
        %v1367 = vand.u32 %v1352, 2147483648
        %v1368 = vor.u32 1.1754944e-38, %v1367
        %v1369 = vsel %vm1366, %v1368, %v1364
        %v1370 = vmul.f32 1.0, %v1369
        %v1371 = vrcp.pop %v1353
        %v1372 = vmul.f32 %v1353, %v1371
        %v1373 = vsub.f32 1.0, %v1372
        %v1374 = vmul.f32 %v1371, %v1373
        %v1375 = vadd.f32 %v1371, %v1374
        %vm1376 = vweird.f32 %v1353
        %vm1377 = vweird.f32 %v1371
        %vm1378 = vmor %vm1376, %vm1377
        %v1379 = vsel %vm1378, %v1371, %v1375
        %v1380 = vand.u32 2147483647, %v1353
        %vm1381 = vcmp.eq.f32.partialorder %v1380, 8.507059e+37
        %v1382 = vand.u32 %v1353, 2147483648
        %v1383 = vor.u32 1.1754944e-38, %v1382
        %v1384 = vsel %vm1381, %v1383, %v1379
        %v1385 = vmul.f32 1.0, %v1384
        %v1386 = vrcp.pop %v1354
        %v1387 = vmul.f32 %v1354, %v1386
        %v1388 = vsub.f32 1.0, %v1387
        %v1389 = vmul.f32 %v1386, %v1388
        %v1390 = vadd.f32 %v1386, %v1389
        %vm1391 = vweird.f32 %v1354
        %vm1392 = vweird.f32 %v1386
        %vm1393 = vmor %vm1391, %vm1392
        %v1394 = vsel %vm1393, %v1386, %v1390
        %v1395 = vand.u32 2147483647, %v1354
        %vm1396 = vcmp.eq.f32.partialorder %v1395, 8.507059e+37
        %v1397 = vand.u32 %v1354, 2147483648
        %v1398 = vor.u32 1.1754944e-38, %v1397
        %v1399 = vsel %vm1396, %v1398, %v1394
        %v1400 = vmul.f32 1.0, %v1399
        %v1401 = vrcp.pop %v1355
        %v1402 = vmul.f32 %v1355, %v1401
        %v1403 = vsub.f32 1.0, %v1402
        %v1404 = vmul.f32 %v1401, %v1403
        %v1405 = vadd.f32 %v1401, %v1404
        %vm1406 = vweird.f32 %v1355
        %vm1407 = vweird.f32 %v1401
        %vm1408 = vmor %vm1406, %vm1407
        %v1409 = vsel %vm1408, %v1401, %v1405
        %v1410 = vand.u32 2147483647, %v1355
        %vm1411 = vcmp.eq.f32.partialorder %v1410, 8.507059e+37
        %v1412 = vand.u32 %v1355, 2147483648
        %v1413 = vor.u32 1.1754944e-38, %v1412
        %v1414 = vsel %vm1411, %v1413, %v1409
        %v1415 = vmul.f32 1.0, %v1414
        %v1416 = vmul.f32 %v1336, %v1370
        %v1417 = vmul.f32 %v1337, %v1385
        %v1418 = vmul.f32 %v1338, %v1400
        %v1419 = vmul.f32 %v1339, %v1415
        %v1420 = vld [vmem:[%s15] sm:$0x1]
        %vm1421 = vcmask 261248
        %1422 = vst.msk [vmem:[#allocation3] sm:$0xff] %vm1421, %v1416
        %1423 = vst.msk [vmem:[#allocation3 + $0x8] sm:$0xff] %vm1421, %v1417
        %1424 = vst.msk [vmem:[#allocation3 + $0x10] sm:$0xff] %vm1421, %v1418
        %1425 = vst.msk [vmem:[#allocation3 + $0x18] sm:$0xff] %vm1421, %v1419
        %vm1426 = vcmask 122880
        %1427 = vst.msk [vmem:[#allocation3] sm:$0x1] %vm1426, 0.0
        %1428 = vst.msk [vmem:[#allocation3 + $0x10] sm:$0x1] %vm1426, 0.0
        %1433 = vrot.lane.b32.xlu0 %v1416, 112
        %v1434 = vpop.permute.xlu0 %1433
        %1435 = vrot.lane.b32.xlu0 %v1417, 112
        %v1436 = vpop.permute.xlu0 %1435
        %1437 = vrot.lane.b32.xlu0 %v1418, 112
        %v1438 = vpop.permute.xlu0 %1437
        %1439 = vrot.lane.b32.xlu0 %v1419, 112
        %v1440 = vpop.permute.xlu0 %1439
        %1445 = vst.msk [vmem:[#allocation3 + $0x1] sm:$0xff] %vm1098, %v1434
        %vm1446 = vcmask 129024
        %1447 = vst.msk [vmem:[#allocation3 + $0x9] sm:$0x7f] %vm1446, %v1436
        %1448 = vst.msk [vmem:[#allocation3 + $0x11] sm:$0xff] %vm1098, %v1438
        %1449 = vst.msk [vmem:[#allocation3 + $0x19] sm:$0x7f] %vm1446, %v1440
        %vm1450 = vcmask 385280
        %1451 = vst.msk [vmem:[#allocation3 + $0xf] sm:$0x1] %vm1450, 0.0
        %1452 = vst.msk [vmem:[#allocation3 + $0x1f] sm:$0x1] %vm1450, 0.0
        %1453 = vrot.lane.b32.xlu0 %v1416, 16
        %v1454 = vpop.permute.xlu0 %1453
        %1455 = vrot.lane.b32.xlu0 %v1417, 16
        %v1456 = vpop.permute.xlu0 %1455
        %1457 = vrot.lane.b32.xlu0 %v1418, 16
        %v1458 = vpop.permute.xlu0 %1457
        %1459 = vrot.lane.b32.xlu0 %v1419, 16
        %v1460 = vpop.permute.xlu0 %1459
        %vm1465 = vcmask 392449
        %1466 = vst.msk [vmem:[#allocation3 - $0x1] sm:$0xfe] %vm1465, %v1454
        %vm1467 = vcmask 392448
        %1468 = vst.msk [vmem:[#allocation3 + $0x7] sm:$0xff] %vm1467, %v1456
        %1469 = vst.msk [vmem:[#allocation3 + $0xf] sm:$0xfe] %vm1465, %v1458
        %1470 = vst.msk [vmem:[#allocation3 + $0x17] sm:$0xff] %vm1467, %v1460
        %v1471 = vld [vmem:[#allocation3] sm:$0xff]
        %v1472 = vld [vmem:[#allocation3 + $0x8] sm:$0xff]
        %v1473 = vld [vmem:[#allocation3 + $0x10] sm:$0xff]
        %v1474 = vld [vmem:[#allocation3 + $0x18] sm:$0xff]
        %v1475 = vld [vmem:[%s14] sm:$0xff]
        %v1476 = vld [vmem:[%s14 + $0x8] sm:$0xff]
        %v1477 = vld [vmem:[%s14 + $0x10] sm:$0xff]
        %v1478 = vld [vmem:[%s14 + $0x18] sm:$0xff]
        %v1479 = vld [vmem:[%s14 + $0x20] sm:$0xff]
        %v1480 = vld [vmem:[%s14 + $0x28] sm:$0xff]
        %v1482 = vperm.slane %v1420, 0
        %vm1484 = vcmask 392192
        %v1486 = vsel %vm1484, %v1471, 0
        %v1489 = vsel %vm1484, %v1472, 0
        %v1492 = vsel %vm1484, %v1473, 0
        %v1495 = vsel %vm1484, %v1474, 0
        %1497 = vmatpush.msra.mxu0 0.0
        %1498 = vmatpush.msra.mxu0 0.0
        %1499 = vmatpush.msra.mxu0 0.0
        %1500 = vmatpush.msra.mxu0 0.0
        %1501 = vmatpush.msra.mxu0 0.0
        %1502 = vmatpush.msra.mxu0 0.0
        %1503 = vmatpush.msra.mxu0 0.0
        %1504 = vmatpush.msra.mxu0 0.0
        %1505 = vmatpush.msra.mxu0 0.0
        %1506 = vmatpush.msra.mxu0 0.0
        %1507 = vmatpush.msra.mxu0 %v1480
        %1508 = vmatpush.msra.mxu0 %v1479
        %1509 = vmatpush.msra.mxu0 %v1478
        %1510 = vmatpush.msra.mxu0 %v1477
        %1511 = vmatpush.msra.mxu0 %v1476
        %1512 = vmatpush.msra.mxu0 %v1475
        %1513 = vmatmul.f32.gmra.mxu0 %v1486
        %v1514 = vpop.f32.mrf.mxu0
        %v1515 = vadd.f32 %v1482, %v1514
        %1516 = vmatmul.f32.gmra.mxu0 %v1489
        %v1517 = vpop.f32.mrf.mxu0
        %v1518 = vadd.f32 %v1482, %v1517
        %1519 = vmatmul.f32.gmra.mxu0 %v1492
        %v1520 = vpop.f32.mrf.mxu0
        %v1521 = vadd.f32 %v1482, %v1520
        %1522 = vmatmul.f32.gmra.mxu0 %v1495
        %v1523 = vpop.f32.mrf.mxu0
        %v1524 = vadd.f32 %v1482, %v1523
        %1525 = vdwg.mxu0
        %v1526 = vld [vmem:[%s16] sm:$0xff]
        %v1527 = vld [vmem:[%s17] sm:$0x1]
        %v1529 = vperm.slane %v1527, 0
        %v1532 = vsel %vm667, %v613, 0
        %v1535 = vsel %vm667, %v614, 0
        %v1538 = vsel %vm667, %v647, 0
        %v1541 = vsel %vm667, %v648, 0
        %1543 = vmatpush.msra.mxu0 0.0
        %1544 = vmatpush.msra.mxu0 0.0
        %1545 = vmatpush.msra.mxu0 0.0
        %1546 = vmatpush.msra.mxu0 0.0
        %1547 = vmatpush.msra.mxu0 0.0
        %1548 = vmatpush.msra.mxu0 0.0
        %1549 = vmatpush.msra.mxu0 0.0
        %1550 = vmatpush.msra.mxu0 0.0
        %1551 = vmatpush.msra.mxu0 0.0
        %1552 = vmatpush.msra.mxu0 0.0
        %1553 = vmatpush.msra.mxu0 0.0
        %1554 = vmatpush.msra.mxu0 0.0
        %1555 = vmatpush.msra.mxu0 0.0
        %1556 = vmatpush.msra.mxu0 0.0
        %1557 = vmatpush.msra.mxu0 0.0
        %1558 = vmatpush.msra.mxu0 %v1526
        %1559 = vmatmul.f32.gmra.mxu0 %v1532
        %v1560 = vpop.f32.mrf.mxu0
        %v1561 = vadd.f32 %v1529, %v1560
        %1562 = vmatmul.f32.gmra.mxu0 %v1535
        %v1563 = vpop.f32.mrf.mxu0
        %v1564 = vadd.f32 %v1529, %v1563
        %1565 = vmatmul.f32.gmra.mxu0 %v1538
        %v1566 = vpop.f32.mrf.mxu0
        %v1567 = vadd.f32 %v1529, %v1566
        %1568 = vmatmul.f32.gmra.mxu0 %v1541
        %v1569 = vpop.f32.mrf.mxu0
        %v1570 = vadd.f32 %v1529, %v1569
        %1571 = vdwg.mxu0
        %v1572 = vadd.f32 %v1515, %v1561
        %v1573 = vadd.f32 %v1518, %v1564
        %v1574 = vadd.f32 %v1521, %v1567
        %v1575 = vadd.f32 %v1524, %v1570
        %1576 = vxpose.xlu0.b32.start [1/16] %v1572, 128
        %1577 = vxpose.xlu0.b32.cont [2/16] %v1573, 128
        %1578 = vxpose.xlu0.b32.cont [3/16] 0.0, 128
        %1579 = vxpose.xlu0.b32.cont [4/16] 0.0, 128
        %1580 = vxpose.xlu0.b32.cont [5/16] 0.0, 128
        %1581 = vxpose.xlu0.b32.cont [6/16] 0.0, 128
        %1582 = vxpose.xlu0.b32.cont [7/16] 0.0, 128
        %1583 = vxpose.xlu0.b32.cont [8/16] 0.0, 128
        %1584 = vxpose.xlu0.b32.cont [9/16] 0.0, 128
        %1585 = vxpose.xlu0.b32.cont [10/16] 0.0, 128
        %1586 = vxpose.xlu0.b32.cont [11/16] 0.0, 128
        %1587 = vxpose.xlu0.b32.cont [12/16] 0.0, 128
        %1588 = vxpose.xlu0.b32.cont [13/16] 0.0, 128
        %1589 = vxpose.xlu0.b32.cont [14/16] 0.0, 128
        %1590 = vxpose.xlu0.b32.cont [15/16] 0.0, 128
        %1591 = vxpose.xlu0.b32.end [16/16] 0.0, 128
        %v1592 = vpop.trf.xlu0
        %v1593 = vpop.trf.xlu0
        %v1594 = vpop.trf.xlu0
        %v1595 = vpop.trf.xlu0
        %v1596 = vpop.trf.xlu0
        %v1597 = vpop.trf.xlu0
        %v1598 = vpop.trf.xlu0
        %v1599 = vpop.trf.xlu0
        %v1600 = vpop.trf.xlu0
        %v1601 = vpop.trf.xlu0
        %v1602 = vpop.trf.xlu0
        %v1603 = vpop.trf.xlu0
        %v1604 = vpop.trf.xlu0
        %v1605 = vpop.trf.xlu0
        %v1606 = vpop.trf.xlu0
        %v1607 = vpop.trf.xlu0
        %1608 = vst.msk [vmem:[%s583] sm:$0xff] %vm1098, %v1592
        %1609 = vst.msk [vmem:[%s583 + $0x8] sm:$0xff] %vm1098, %v1593
        %1610 = vxpose.xlu0.b32.start [1/16] %v1574, 128
        %1611 = vxpose.xlu0.b32.cont [2/16] %v1575, 128
        %1612 = vxpose.xlu0.b32.cont [3/16] 0.0, 128
        %1613 = vxpose.xlu0.b32.cont [4/16] 0.0, 128
        %1614 = vxpose.xlu0.b32.cont [5/16] 0.0, 128
        %1615 = vxpose.xlu0.b32.cont [6/16] 0.0, 128
        %1616 = vxpose.xlu0.b32.cont [7/16] 0.0, 128
        %1617 = vxpose.xlu0.b32.cont [8/16] 0.0, 128
        %1618 = vxpose.xlu0.b32.cont [9/16] 0.0, 128
        %1619 = vxpose.xlu0.b32.cont [10/16] 0.0, 128
        %1620 = vxpose.xlu0.b32.cont [11/16] 0.0, 128
        %1621 = vxpose.xlu0.b32.cont [12/16] 0.0, 128
        %1622 = vxpose.xlu0.b32.cont [13/16] 0.0, 128
        %1623 = vxpose.xlu0.b32.cont [14/16] 0.0, 128
        %1624 = vxpose.xlu0.b32.cont [15/16] 0.0, 128
        %1625 = vxpose.xlu0.b32.end [16/16] 0.0, 128
        %v1626 = vpop.trf.xlu0
        %v1627 = vpop.trf.xlu0
        %v1628 = vpop.trf.xlu0
        %v1629 = vpop.trf.xlu0
        %v1630 = vpop.trf.xlu0
        %v1631 = vpop.trf.xlu0
        %v1632 = vpop.trf.xlu0
        %v1633 = vpop.trf.xlu0
        %v1634 = vpop.trf.xlu0
        %v1635 = vpop.trf.xlu0
        %v1636 = vpop.trf.xlu0
        %v1637 = vpop.trf.xlu0
        %v1638 = vpop.trf.xlu0
        %v1639 = vpop.trf.xlu0
        %v1640 = vpop.trf.xlu0
        %v1641 = vpop.trf.xlu0
        %s1642 = scalar_lea.vmem %s583, 16 [#allocation4]
        %1643 = vst.msk [vmem:[%s1642] sm:$0xff] %vm1098, %v1626
        %1644 = vst.msk [vmem:[%s1642 + $0x8] sm:$0xff] %vm1098, %v1627
        %s1645 = sand.u32 %s428, 1
        %s1646 = scalar_lea.sflag [#allocation5], %s1645
        %s1647 = sand.u32 %s428, 1
        %s1648 = smul.addr %s1647, 32
        %s1649 = scalar_lea.vmem [#allocation4], %s1648
        // Predicated region
        $region93: #{tpu_custom_call.1} parent=91 // pred_check
          %p1650 = pneg %p438
        $region94: #{tpu_custom_call.1} parent=91 // pred_check_branch
          %1652 = sbr.rel (%p1650) target = $region96
        $region95: #{tpu_custom_call.1} parent=91 // pred_region
          %s1653 = smul.u32 2, %s32
          %1655 = vsyncadd %s1646, 0
          %s1656 = smul.addr %s1653, 2
          %s1657 = smul.addr %s1656, 8
          %s1658 = scalar_lea.hbm %s18, %s1657
          %s1659 = sshll.u32 %s1649, 4
          %s1660 = int_to_ptr.vmem [resolvable:$true] %s1659
          %s1661 = sshll.u32 %s1658, 4
          %s1662 = int_to_ptr.hbm [resolvable:$true] %s1661
          %1667 = dma.vmem_to_hbm [thread:$0]  %s1660, 512, %s1662, %s1646, 128, 128, 8
        $region96: #{tpu_custom_call.1} parent=91 // pred_fallthru
          _
      $region92: #{tpu_custom_call.1} parent=5 // pred_fallthru
        _
      %p1668 = scmp.le.s32.totalorder 2, %s27
      // Predicated region
      $region97: #{tpu_custom_call.1} parent=5 // pred_check
        %p1669 = pneg %p1668
      $region98: #{tpu_custom_call.1} parent=5 // pred_check_branch
        %1671 = sbr.rel (%p1669) target = $region100
      $region99: #{tpu_custom_call.1} parent=5 // pred_region
        %s1672 = ssub.s32 %s27, 2
        // Predicated region
        $region101: #{tpu_custom_call.1} parent=99 // pred_check
          %p1673 = pneg %p444
        $region102: #{tpu_custom_call.1} parent=99 // pred_check_branch
          %1675 = sbr.rel (%p1673) target = $region104
        $region103: #{tpu_custom_call.1} parent=99 // pred_region
          %s1676 = sand.u32 %s429, 1
          %s1677 = scalar_lea.sflag [#allocation5], %s1676
          %s1678 = sand.u32 %s429, 1
          %s1679 = smul.addr %s1678, 32
          %s1680 = scalar_lea.vmem [#allocation4], %s1679
          %1682 = dma.done %s1677, 512
        $region104: #{tpu_custom_call.1} parent=99 // pred_fallthru
          _
      $region100: #{tpu_custom_call.1} parent=5 // pred_fallthru
        _
    $region6: #{tpu_custom_call.1} parent=1 // loop_footer
      %s31 = sadd.s32 1, %s27
    $region7: #{tpu_custom_call.1} parent=1 // loop_footer_branch
      %26 = sbr.rel target = $region3
    $region8: #{tpu_custom_call.1} parent=1 // loop_exit
      _
    %1683 = vsyncpa [#allocation5], 1
    %s1684 = scalar_lea.sflag [#allocation5], 1
    %1685 = vsyncpa %s1684, 1

</llo_original>
